<compile_context>
chip_gen: v7x
topology: tpu7x:2x2x1
jax: 0.10.0
libtpu: 0.0.40
codegen_flags: <defaults>
</compile_context>

<pallas_src>
import functools

import jax
import jax.numpy as jnp
from jax.experimental import pallas as pl
from jax.experimental.pallas import tpu as pltpu

NEG_SLOPE = 0.01          # F.leaky_relu default negative slope
H_PAD = 128               # branch hidden width 100 padded to 128
H1_PAD = 64               # head hidden width 50 padded to 64
OUT_LANES = 16            # fused output: lanes 0..7 = repr, lane 8 = out
HC = H1_PAD + OUT_LANES   # fused head-hidden + proj pass-through width (80)


def _leaky(v):
    return jnp.where(v >= 0, v, NEG_SLOPE * v)


def _round_up(a, b):
    return ((a + b - 1) // b) * b


# ---------------------------------------------------------------------------
# Kernel
# ---------------------------------------------------------------------------
def crnet_kernel(
    tx_ref,                 # (TN, t_dim + x_dim)            activations tile (mm dtype)
    wa_ref, ba_ref,         # (txd, 2*H_PAD), (1, 2*H_PAD)   fused branch layer-1
    wb_ref, bb_ref,         # (2*H_PAD, 2*z), (1, 2*z)       fused branch layer-2 (block-diag)
    w1c_ref, b1c_ref,       # (2*z, HC),  (1, HC)            head Linear1 ++ proj (fused)
    wohc_ref, bo_ref,       # (HC, 16),   (1, 16)            head Linear4 ++ proj pass-through
    out_ref,                # (TN, 16)   lanes 0..7 = repr, lane 8 = out
):
    f32 = jnp.float32
    mm = wa_ref.dtype       # matmul operand dtype: bf16 fast path or f32 exact path
    prec = (jax.lax.Precision.HIGHEST if mm == jnp.float32
            else jax.lax.Precision.DEFAULT)

    # Fused first layer of both branches: [t_h | x_h]; padded lanes stay 0.
    h1 = _leaky(jnp.dot(tx_ref[...], wa_ref[...],
                        preferred_element_type=f32, precision=prec)
                + ba_ref[...])

    # Fused second layer (block-diagonal): z = [t_z | x_z] == concat(t_tmp, x_tmp).
    z = _leaky(jnp.dot(h1.astype(mm), wb_ref[...],
                       preferred_element_type=f32, precision=prec)
               + bb_ref[...])

    # Single MXU pass over z: lanes 0..H1_PAD-1 = head hidden pre-activation,
    # lanes H1_PAD..H1_PAD+15 = proj(x_z) values (bias pb lives in bo).
    hc = (jnp.dot(z.astype(mm), w1c_ref[...],
                  preferred_element_type=f32, precision=prec)
          + b1c_ref[...])
    lane = jax.lax.broadcasted_iota(jnp.int32, hc.shape, 1)
    h = jnp.where(lane < H1_PAD, _leaky(hc), hc)   # leaky only on the head lanes

    # Final fused output: lane 8 = Linear4(h); lanes 0..7 = proj lanes passed
    # straight through via identity rows in wohc.  Biases (pb, b4) live in bo.
    out_ref[...] = (jnp.dot(h.astype(mm), wohc_ref[...],
                            preferred_element_type=f32, precision=prec)
                    + bo_ref[...])


# ---------------------------------------------------------------------------
# Wrapper
# ---------------------------------------------------------------------------
def _const_spec(shape):
    # Whole tensor VMEM-resident; identical block for every grid step.
    return pl.BlockSpec(shape, lambda i: (0,) * len(shape))


def _choose_tiling(n, tile_n):
    """Pick (tn, n_pad): >=2 (even) grid steps so both v7x TensorCores get
    work, and padding waste bounded by <1 vreg row regardless of n."""
    n8 = _round_up(max(n, 8), 8)
    k = max(2, -(-n8 // tile_n))       # number of grid steps
    k += k % 2                         # prefer an even step count (megacore)
    tn = _round_up(-(-n8 // k), 8)
    return tn, tn * k


@functools.partial(jax.jit, static_argnames=("tile_n",))
def crnet_forward(t, x, packed, tile_n=2048):
    n = t.shape[0]
    txd = t.shape[1] + x.shape[1]
    mm_dtype = packed["wa"].dtype       # bf16 fast path or f32 exact path

    # Input concat + pad happen once in XLA (cheap); the kernel itself never
    # relayouts along the lane axis.
    tx = jnp.concatenate([t, x], axis=1).astype(mm_dtype)

    tn, n_pad = _choose_tiling(n, tile_n)
    if n_pad != n:
        tx = jnp.pad(tx, ((0, n_pad - n), (0, 0)))
    grid = (n_pad // tn,)

    operands = (
        tx,
        packed["wa"], packed["ba"],
        packed["wb"], packed["bb"],
        packed["w1c"], packed["b1c"],
        packed["wohc"], packed["bo"],
    )
    in_specs = [pl.BlockSpec((tn, txd), lambda i: (i, 0))]
    in_specs += [_const_spec(op.shape) for op in operands[1:]]

    z2 = packed["wb"].shape[1]
    flops = 2 * n_pad * (txd * 2 * H_PAD + 2 * H_PAD * z2 + z2 * HC
                         + HC * OUT_LANES)
    bytes_accessed = (
        n_pad * txd * tx.dtype.itemsize
        + n_pad * OUT_LANES * 4
        + sum(int(op.size) * op.dtype.itemsize for op in operands[1:])
    )

    fused = pl.pallas_call(
        crnet_kernel,
        grid=grid,
        in_specs=in_specs,
        out_specs=pl.BlockSpec((tn, OUT_LANES), lambda i: (i, 0)),
        out_shape=jax.ShapeDtypeStruct((n_pad, OUT_LANES), jnp.float32),
        compiler_params=pltpu.CompilerParams(
            dimension_semantics=("parallel",),
            vmem_limit_bytes=32 << 20,
        ),
        cost_estimate=pl.CostEstimate(
            flops=flops, transcendentals=0, bytes_accessed=bytes_accessed),
    )(*operands)

    rep = fused[:n, :8]
    out = fused[:n, 8:9]
    return rep, out


# ---------------------------------------------------------------------------
# Parameter construction (PyTorch nn.Linear-style init) + packing
# ---------------------------------------------------------------------------
def init_linear(key, in_dim, out_dim):
    """PyTorch nn.Linear init: U(-1/sqrt(fan_in), +1/sqrt(fan_in)).
    Weight stored transposed as (in_dim, out_dim); bias as (1, out_dim)."""
    kw, kb = jax.random.split(key)
    bound = 1.0 / jnp.sqrt(jnp.float32(in_dim))
    w = jax.random.uniform(kw, (in_dim, out_dim), jnp.float32, -bound, bound)
    b = jax.random.uniform(kb, (1, out_dim), jnp.float32, -bound, bound)
    return w, b


def init_crnet_params(key, t_dim, x_dim, z_dim):
    keys = jax.random.split(key, 7)
    tw1, tb1 = init_linear(keys[0], t_dim, 100)
    tw2, tb2 = init_linear(keys[1], 100, z_dim)
    xw1, xb1 = init_linear(keys[2], x_dim, 100)
    xw2, xb2 = init_linear(keys[3], 100, z_dim)
    w1, b1 = init_linear(keys[4], 2 * z_dim, 50)
    w4, b4 = init_linear(keys[5], 50, 1)
    pw, pb = init_linear(keys[6], z_dim, 8)
    return dict(tw1=tw1, tb1=tb1, tw2=tw2, tb2=tb2,
                xw1=xw1, xb1=xb1, xw2=xw2, xb2=xb2,
                w1=w1, b1=b1, w4=w4, b4=b4, pw=pw, pb=pb)


def pack_crnet_params(p, t_dim, x_dim, z_dim, mm_dtype=jnp.bfloat16):
    """Fused / zero-padded weights for the kernel.  Zero-padding is exact
    (leaky_relu(0)=0; zero rows/cols contribute nothing).  Matmul operands are
    cast to mm_dtype (bf16 MXU fast path); biases stay f32."""
    txd = t_dim + x_dim
    f32 = jnp.float32

    # Layer 1 of both branches: [t | x] @ block_diag(tw1, xw1)  (100 -> 128 pad)
    wa = jnp.zeros((txd, 2 * H_PAD), f32)
    wa = wa.at[:t_dim, :100].set(p["tw1"])
    wa = wa.at[t_dim:, H_PAD:H_PAD + 100].set(p["xw1"])
    ba = jnp.zeros((1, 2 * H_PAD), f32)
    ba = ba.at[:, :100].set(p["tb1"])
    ba = ba.at[:, H_PAD:H_PAD + 100].set(p["xb1"])

    # Layer 2: block_diag(tw2, xw2) -> z = [t_z | x_z] (torch.concat order).
    wb = jnp.zeros((2 * H_PAD, 2 * z_dim), f32)
    wb = wb.at[:100, :z_dim].set(p["tw2"])
    wb = wb.at[H_PAD:H_PAD + 100, z_dim:].set(p["xw2"])
    bb = jnp.concatenate([p["tb2"], p["xb2"]], axis=1)

    # Head Linear1 (50 -> 64 pad) fused with proj as 16 extra output lanes.
    w1c = jnp.zeros((2 * z_dim, HC), f32)
    w1c = w1c.at[:, :50].set(p["w1"])
    w1c = w1c.at[z_dim:, H1_PAD:H1_PAD + 8].set(p["pw"])
    b1c = jnp.zeros((1, HC), f32)
    b1c = b1c.at[:, :50].set(p["b1"])

    # Final layer: rows 0..49 col 8 = Linear4 weights; rows H1_PAD.. = identity
    # that passes the proj lanes straight through to output lanes 0..15.
    wohc = jnp.zeros((HC, OUT_LANES), f32)
    wohc = wohc.at[:50, 8:9].set(p["w4"])
    wohc = wohc.at[H1_PAD:, :].set(jnp.eye(OUT_LANES, dtype=f32))
    bo = jnp.zeros((1, OUT_LANES), f32)
    bo = bo.at[:, :8].set(p["pb"])
    bo = bo.at[:, 8:9].set(p["b4"])

    return dict(
        wa=wa.astype(mm_dtype), ba=ba,
        wb=wb.astype(mm_dtype), bb=bb,
        w1c=w1c.astype(mm_dtype), b1c=b1c,
        wohc=wohc.astype(mm_dtype), bo=bo,
    )


# ---------------------------------------------------------------------------
# Pure-JAX reference (mirrors the PyTorch forward exactly, true-f32 matmuls)
# ---------------------------------------------------------------------------
def _mm(a, b):
    return jnp.dot(a, b, precision=jax.lax.Precision.HIGHEST)


def crnet_reference(t, x, p):
    t_z = _leaky(_mm(_leaky(_mm(t, p["tw1"]) + p["tb1"]), p["tw2"]) + p["tb2"])
    x_z = _leaky(_mm(_leaky(_mm(x, p["xw1"]) + p["xb1"]), p["xw2"]) + p["xb2"])
    inputs = jnp.concatenate([t_z, x_z], axis=1)
    out = _mm(_leaky(_mm(inputs, p["w1"]) + p["b1"]), p["w4"]) + p["b4"]
    rep = _mm(x_z, p["pw"]) + p["pb"]
    return rep, out


if __name__ == "__main__":
    # Small shapes consistent with the module: batch N, t_dim, x_dim, z_dim.
    N, T_DIM, X_DIM, Z_DIM = 8, 4, 16, 32

    key = jax.random.PRNGKey(0)
    k_t, k_x, k_p = jax.random.split(key, 3)
    t = jax.random.normal(k_t, (N, T_DIM), jnp.float32)
    x = jax.random.normal(k_x, (N, X_DIM), jnp.float32)

    params = init_crnet_params(k_p, T_DIM, X_DIM, Z_DIM)
    rep_exp, out_exp = crnet_reference(t, x, params)

    # 1) Exact structural check: f32 packing (precision=HIGHEST path).
    packed_f32 = pack_crnet_params(params, T_DIM, X_DIM, Z_DIM,
                                   mm_dtype=jnp.float32)
    rep32, out32 = crnet_forward(t, x, packed_f32)
    jax.block_until_ready((rep32, out32))
    assert rep32.shape == (N, 8) and out32.shape == (N, 1)
    assert jnp.allclose(rep32, rep_exp, atol=1e-4, rtol=1e-4)
    assert jnp.allclose(out32, out_exp, atol=1e-4, rtol=1e-4)

    # 2) Production fast path: bf16 MXU operands, f32 accumulation.
    packed_bf16 = pack_crnet_params(params, T_DIM, X_DIM, Z_DIM,
                                    mm_dtype=jnp.bfloat16)
    rep16, out16 = crnet_forward(t, x, packed_bf16)
    jax.block_until_ready((rep16, out16))
    assert rep16.shape == (N, 8) and out16.shape == (N, 1)
    assert jnp.allclose(rep16, rep_exp, atol=1e-1, rtol=1e-1)
    assert jnp.allclose(out16, out_exp, atol=1e-1, rtol=1e-1)

    print("KERNEL_OK")
</pallas_src>

<mosaic_0001>
module attributes {stable_mosaic.version = 11 : i64} {
  func.func @crnet_kernel(%arg0: i32, %arg1: memref<8x20xf32, #tpu.memory_space<vmem>>, %arg2: memref<20x256xf32, #tpu.memory_space<vmem>>, %arg3: memref<1x256xf32, #tpu.memory_space<vmem>>, %arg4: memref<256x64xf32, #tpu.memory_space<vmem>>, %arg5: memref<1x64xf32, #tpu.memory_space<vmem>>, %arg6: memref<64x80xf32, #tpu.memory_space<vmem>>, %arg7: memref<1x80xf32, #tpu.memory_space<vmem>>, %arg8: memref<80x16xf32, #tpu.memory_space<vmem>>, %arg9: memref<1x16xf32, #tpu.memory_space<vmem>>, %arg10: memref<8x16xf32, #tpu.memory_space<vmem>>) attributes {dimension_semantics = [#tpu.dimension_semantics<parallel>], iteration_bounds = array<i64: 2>, scalar_prefetch = 0 : i64, scratch_operands = 0 : i64, tpu.core_type = #tpu.core_type<tc>, window_params = [{transform_indices = @transform_0, window_bounds = array<i64: 8, 20>}, {pipeline_mode = #tpu.pipeline_mode<synchronous>, transform_indices = @transform_1, window_bounds = array<i64: 20, 256>}, {pipeline_mode = #tpu.pipeline_mode<synchronous>, transform_indices = @transform_2, window_bounds = array<i64: 1, 256>}, {pipeline_mode = #tpu.pipeline_mode<synchronous>, transform_indices = @transform_3, window_bounds = array<i64: 256, 64>}, {pipeline_mode = #tpu.pipeline_mode<synchronous>, transform_indices = @transform_4, window_bounds = array<i64: 1, 64>}, {pipeline_mode = #tpu.pipeline_mode<synchronous>, transform_indices = @transform_5, window_bounds = array<i64: 64, 80>}, {pipeline_mode = #tpu.pipeline_mode<synchronous>, transform_indices = @transform_6, window_bounds = array<i64: 1, 80>}, {pipeline_mode = #tpu.pipeline_mode<synchronous>, transform_indices = @transform_7, window_bounds = array<i64: 80, 16>}, {pipeline_mode = #tpu.pipeline_mode<synchronous>, transform_indices = @transform_8, window_bounds = array<i64: 1, 16>}, {transform_indices = @transform_9, window_bounds = array<i64: 8, 16>}]} {
    %c0 = arith.constant 0 : index
    %c0_0 = arith.constant 0 : index
    %0 = vector.load %arg1[%c0, %c0_0] : memref<8x20xf32, #tpu.memory_space<vmem>>, vector<8x20xf32>
    %c0_1 = arith.constant 0 : index
    %c0_2 = arith.constant 0 : index
    %1 = vector.load %arg2[%c0_1, %c0_2] : memref<20x256xf32, #tpu.memory_space<vmem>>, vector<20x256xf32>
    %cst = arith.constant dense<0.000000e+00> : vector<8x256xf32>
    %2 = tpu.matmul %0, %1, %cst {dimension_numbers = #tpu.dot_dimension_numbers<[1], [0], [0], [1], [0, 0, 1, 1], [], []>, precision = #tpu.contract_precision<fp32>} : vector<8x20xf32>, vector<20x256xf32>, vector<8x256xf32> -> vector<8x256xf32>
    %c0_3 = arith.constant 0 : index
    %c0_4 = arith.constant 0 : index
    %3 = vector.load %arg3[%c0_3, %c0_4] : memref<1x256xf32, #tpu.memory_space<vmem>>, vector<1x256xf32>
    %4 = vector.broadcast %3 : vector<1x256xf32> to vector<8x256xf32>
    %5 = arith.addf %2, %4 : vector<8x256xf32>
    %cst_5 = arith.constant 0.000000e+00 : f32
    %6 = vector.broadcast %cst_5 : f32 to vector<8x256xf32>
    %7 = arith.cmpf oge, %5, %6 : vector<8x256xf32>
    %cst_6 = arith.constant 0.00999999977 : f32
    %8 = vector.broadcast %cst_6 : f32 to vector<8x256xf32>
    %9 = arith.mulf %8, %5 : vector<8x256xf32>
    %10 = arith.select %7, %5, %9 : vector<8x256xi1>, vector<8x256xf32>
    %c0_7 = arith.constant 0 : index
    %c0_8 = arith.constant 0 : index
    %11 = vector.load %arg4[%c0_7, %c0_8] : memref<256x64xf32, #tpu.memory_space<vmem>>, vector<256x64xf32>
    %cst_9 = arith.constant dense<0.000000e+00> : vector<8x64xf32>
    %12 = tpu.matmul %10, %11, %cst_9 {dimension_numbers = #tpu.dot_dimension_numbers<[1], [0], [0], [1], [0, 0, 1, 1], [], []>, precision = #tpu.contract_precision<fp32>} : vector<8x256xf32>, vector<256x64xf32>, vector<8x64xf32> -> vector<8x64xf32>
    %c0_10 = arith.constant 0 : index
    %c0_11 = arith.constant 0 : index
    %13 = vector.load %arg5[%c0_10, %c0_11] : memref<1x64xf32, #tpu.memory_space<vmem>>, vector<1x64xf32>
    %14 = vector.broadcast %13 : vector<1x64xf32> to vector<8x64xf32>
    %15 = arith.addf %12, %14 : vector<8x64xf32>
    %cst_12 = arith.constant 0.000000e+00 : f32
    %16 = vector.broadcast %cst_12 : f32 to vector<8x64xf32>
    %17 = arith.cmpf oge, %15, %16 : vector<8x64xf32>
    %cst_13 = arith.constant 0.00999999977 : f32
    %18 = vector.broadcast %cst_13 : f32 to vector<8x64xf32>
    %19 = arith.mulf %18, %15 : vector<8x64xf32>
    %20 = arith.select %17, %15, %19 : vector<8x64xi1>, vector<8x64xf32>
    %c0_14 = arith.constant 0 : index
    %c0_15 = arith.constant 0 : index
    %21 = vector.load %arg6[%c0_14, %c0_15] : memref<64x80xf32, #tpu.memory_space<vmem>>, vector<64x80xf32>
    %cst_16 = arith.constant dense<0.000000e+00> : vector<8x80xf32>
    %22 = tpu.matmul %20, %21, %cst_16 {dimension_numbers = #tpu.dot_dimension_numbers<[1], [0], [0], [1], [0, 0, 1, 1], [], []>, precision = #tpu.contract_precision<fp32>} : vector<8x64xf32>, vector<64x80xf32>, vector<8x80xf32> -> vector<8x80xf32>
    %c0_17 = arith.constant 0 : index
    %c0_18 = arith.constant 0 : index
    %23 = vector.load %arg7[%c0_17, %c0_18] : memref<1x80xf32, #tpu.memory_space<vmem>>, vector<1x80xf32>
    %24 = vector.broadcast %23 : vector<1x80xf32> to vector<8x80xf32>
    %25 = arith.addf %22, %24 : vector<8x80xf32>
    %26 = tpu.iota {dimensions = array<i32: 1>} : vector<8x80xi32>
    %c64_i32 = arith.constant 64 : i32
    %27 = vector.broadcast %c64_i32 : i32 to vector<8x80xi32>
    %28 = arith.cmpi slt, %26, %27 : vector<8x80xi32>
    %cst_19 = arith.constant 0.000000e+00 : f32
    %29 = vector.broadcast %cst_19 : f32 to vector<8x80xf32>
    %30 = arith.cmpf oge, %25, %29 : vector<8x80xf32>
    %cst_20 = arith.constant 0.00999999977 : f32
    %31 = vector.broadcast %cst_20 : f32 to vector<8x80xf32>
    %32 = arith.mulf %31, %25 : vector<8x80xf32>
    %33 = arith.select %30, %25, %32 : vector<8x80xi1>, vector<8x80xf32>
    %34 = arith.select %28, %33, %25 : vector<8x80xi1>, vector<8x80xf32>
    %c0_21 = arith.constant 0 : index
    %c0_22 = arith.constant 0 : index
    %35 = vector.load %arg8[%c0_21, %c0_22] : memref<80x16xf32, #tpu.memory_space<vmem>>, vector<80x16xf32>
    %cst_23 = arith.constant dense<0.000000e+00> : vector<8x16xf32>
    %36 = tpu.matmul %34, %35, %cst_23 {dimension_numbers = #tpu.dot_dimension_numbers<[1], [0], [0], [1], [0, 0, 1, 1], [], []>, precision = #tpu.contract_precision<fp32>} : vector<8x80xf32>, vector<80x16xf32>, vector<8x16xf32> -> vector<8x16xf32>
    %c0_24 = arith.constant 0 : index
    %c0_25 = arith.constant 0 : index
    %37 = vector.load %arg9[%c0_24, %c0_25] : memref<1x16xf32, #tpu.memory_space<vmem>>, vector<1x16xf32>
    %38 = vector.broadcast %37 : vector<1x16xf32> to vector<8x16xf32>
    %39 = arith.addf %36, %38 : vector<8x16xf32>
    %c0_26 = arith.constant 0 : index
    %c0_27 = arith.constant 0 : index
    %40 = vector.load %arg10[%c0_26, %c0_27] : memref<8x16xf32, #tpu.memory_space<vmem>>, vector<8x16xf32>
    tpu.vector_store %arg10[%c0_26, %c0_27], %39 {strides = array<i32>} : memref<8x16xf32, #tpu.memory_space<vmem>>, vector<8x16xf32>,
    return
  }
  func.func @transform_0(%arg0: i32) -> (i32, i32) {
    %c0_i32 = arith.constant 0 : i32
    %c0_i32_0 = arith.constant 0 : i32
    return %arg0, %c0_i32 : i32, i32
  }
  func.func @transform_1(%arg0: i32) -> (i32, i32) {
    %c0_i32 = arith.constant 0 : i32
    %c0_i32_0 = arith.constant 0 : i32
    %c0_i32_1 = arith.constant 0 : i32
    return %c0_i32, %c0_i32_0 : i32, i32
  }
  func.func @transform_2(%arg0: i32) -> (i32, i32) {
    %c0_i32 = arith.constant 0 : i32
    %c0_i32_0 = arith.constant 0 : i32
    %c0_i32_1 = arith.constant 0 : i32
    return %c0_i32, %c0_i32_0 : i32, i32
  }
  func.func @transform_3(%arg0: i32) -> (i32, i32) {
    %c0_i32 = arith.constant 0 : i32
    %c0_i32_0 = arith.constant 0 : i32
    %c0_i32_1 = arith.constant 0 : i32
    return %c0_i32, %c0_i32_0 : i32, i32
  }
  func.func @transform_4(%arg0: i32) -> (i32, i32) {
    %c0_i32 = arith.constant 0 : i32
    %c0_i32_0 = arith.constant 0 : i32
    %c0_i32_1 = arith.constant 0 : i32
    return %c0_i32, %c0_i32_0 : i32, i32
  }
  func.func @transform_5(%arg0: i32) -> (i32, i32) {
    %c0_i32 = arith.constant 0 : i32
    %c0_i32_0 = arith.constant 0 : i32
    %c0_i32_1 = arith.constant 0 : i32
    return %c0_i32, %c0_i32_0 : i32, i32
  }
  func.func @transform_6(%arg0: i32) -> (i32, i32) {
    %c0_i32 = arith.constant 0 : i32
    %c0_i32_0 = arith.constant 0 : i32
    %c0_i32_1 = arith.constant 0 : i32
    return %c0_i32, %c0_i32_0 : i32, i32
  }
  func.func @transform_7(%arg0: i32) -> (i32, i32) {
    %c0_i32 = arith.constant 0 : i32
    %c0_i32_0 = arith.constant 0 : i32
    %c0_i32_1 = arith.constant 0 : i32
    return %c0_i32, %c0_i32_0 : i32, i32
  }
  func.func @transform_8(%arg0: i32) -> (i32, i32) {
    %c0_i32 = arith.constant 0 : i32
    %c0_i32_0 = arith.constant 0 : i32
    %c0_i32_1 = arith.constant 0 : i32
    return %c0_i32, %c0_i32_0 : i32, i32
  }
  func.func @transform_9(%arg0: i32) -> (i32, i32) {
    %c0_i32 = arith.constant 0 : i32
    %c0_i32_0 = arith.constant 0 : i32
    return %arg0, %c0_i32 : i32, i32
  }
}

</mosaic_0001>

<llo_original>
// kernel: crnet_forward.1
$region0: #{crnet_forward.1}
  #allocation0 [shape = 'u32[]', space=smem, size = 0x4, offset = 0x4, fixed_abs, tag = 'smem constant byte address 0x4 - core index']
  #allocation1 [shape = 'u32[144,128]{1,0:T(1,128)}', space=vmem, size = 0x12000, scoped, tag = 'internal scratch']
  %s0 = inlined_call_operand.vmem [shape: f32[16,20], index: 0, kind: input, shape index: {}]
  %s1 = inlined_call_operand.vmem [shape: f32[20,256], index: 1, kind: input, shape index: {}]
  %s2 = inlined_call_operand.vmem [shape: f32[1,256], index: 2, kind: input, shape index: {}]
  %s3 = inlined_call_operand.vmem [shape: f32[256,64], index: 3, kind: input, shape index: {}]
  %s4 = inlined_call_operand.vmem [shape: f32[1,64], index: 4, kind: input, shape index: {}]
  %s5 = inlined_call_operand.vmem [shape: f32[64,80], index: 5, kind: input, shape index: {}]
  %s6 = inlined_call_operand.vmem [shape: f32[1,80], index: 6, kind: input, shape index: {}]
  %s7 = inlined_call_operand.vmem [shape: f32[80,16], index: 7, kind: input, shape index: {}]
  %s8 = inlined_call_operand.vmem [shape: f32[1,16], index: 8, kind: input, shape index: {}]
  %s9 = inlined_call_operand.vmem [shape: f32[16,16], index: 9, kind: output, shape index: {}]
  %s10 = sld [smem:[#allocation0]]
  $region69: #{crnet_forward.1} parent=0
    _
  %s12 = ssub.s32 1, %s10
  %s13 = scalar_select 0, %s12, %s10
  loop: start=0, step=1, limit=4
  $region2: #{crnet_forward.1} parent=0 // loop_pre_header
    _
  $region3: #{crnet_forward.1} parent=0 // loop_header
    %s15 = sphi 0, %s19
    %p16 = scmp.ge.s32.totalorder %s15, 4
    %s25 = sphi 0, %s27
    %s28 = sphi 0, %s25
    %s29 = sphi 0, %s28
    %s45 = sphi 0, %s29
    %s49 = sphi 0, %s49
    %s51 = sphi 0, %s49
    %s52 = sphi 0, %s51
    %s66 = sphi 0, %s52
    %s70 = sphi 0, %s70
    %s72 = sphi 0, %s70
    %s73 = sphi 0, %s72
    %s87 = sphi 0, %s73
    %s91 = sphi 0, %s91
    %s93 = sphi 0, %s91
    %s94 = sphi 0, %s93
    %s108 = sphi 0, %s94
    %s112 = sphi 0, %s112
    %s114 = sphi 0, %s112
    %s115 = sphi 0, %s114
    %s129 = sphi 0, %s115
    %s133 = sphi 0, %s133
    %s135 = sphi 0, %s133
    %s136 = sphi 0, %s135
    %s150 = sphi 0, %s136
    %s154 = sphi 0, %s154
    %s156 = sphi 0, %s154
    %s157 = sphi 0, %s156
    %s171 = sphi 0, %s157
    %s175 = sphi 0, %s175
    %s177 = sphi 0, %s175
    %s178 = sphi 0, %s177
    %s192 = sphi 0, %s178
    %s196 = sphi 0, %s196
    %s198 = sphi 0, %s196
    %s199 = sphi 0, %s198
    %s213 = sphi 0, %s199
    %s219 = sphi 0, %s221
    %s222 = sphi 0, %s219
    %s223 = sphi 0, %s222
    %s239 = sphi 0, %s223
  $region4: #{crnet_forward.1} parent=0 // loop_header_branch
    %18 = sbr.rel (%p16) target = $region8
  $region5: #{crnet_forward.1} parent=0 // loop_body
    %s20 = ssub.s32 %s15, 1
    %s21 = ssub.s32 %s15, 2
    %s22 = sadd.s32 %s15, 1
    %s23 = ssub.s32 %s15, %s22
    %p24 = scmp.eq.s32.totalorder %s23, 0
    %s26 = sadd.s32 %s25, 1
    %s27 = scalar_select %p24, %s25, %s26
    %p30 = pneg %p24
    %p31 = scmp.eq.s32.totalorder %s15, 1
    %p32 = por %p30, %p31
    %p33 = scmp.ne.s32.totalorder %s25, %s28
    %p34 = scmp.eq.s32.totalorder %s15, 0
    %p35 = por %p33, %p34
    %p36 = scmp.ne.s32.totalorder %s25, %s28
    %p37 = scmp.eq.s32.totalorder %s20, 1
    %p38 = por %p36, %p37
    %p39 = scmp.ne.s32.totalorder %s28, %s29
    %p40 = scmp.eq.s32.totalorder %s20, 0
    %p41 = por %p39, %p40
    %p42 = scmp.ne.s32.totalorder %s28, %s29
    %p43 = scmp.eq.s32.totalorder %s21, 1
    %p44 = por %p42, %p43
    %p46 = scmp.ne.s32.totalorder %s29, %s45
    %p47 = scmp.eq.s32.totalorder %s21, 0
    %p48 = por %p46, %p47
    %s50 = sadd.s32 %s49, 1
    %p53 = scmp.eq.s32.totalorder %s15, 1
    %p54 = scmp.ne.s32.totalorder %s49, %s51
    %p55 = scmp.eq.s32.totalorder %s15, 0
    %p56 = por %p54, %p55
    %p57 = scmp.ne.s32.totalorder %s49, %s51
    %p58 = scmp.eq.s32.totalorder %s20, 1
    %p59 = por %p57, %p58
    %p60 = scmp.ne.s32.totalorder %s51, %s52
    %p61 = scmp.eq.s32.totalorder %s20, 0
    %p62 = por %p60, %p61
    %p63 = scmp.ne.s32.totalorder %s51, %s52
    %p64 = scmp.eq.s32.totalorder %s21, 1
    %p65 = por %p63, %p64
    %p67 = scmp.ne.s32.totalorder %s52, %s66
    %p68 = scmp.eq.s32.totalorder %s21, 0
    %p69 = por %p67, %p68
    %s71 = sadd.s32 %s70, 1
    %p74 = scmp.eq.s32.totalorder %s15, 1
    %p75 = scmp.ne.s32.totalorder %s70, %s72
    %p76 = scmp.eq.s32.totalorder %s15, 0
    %p77 = por %p75, %p76
    %p78 = scmp.ne.s32.totalorder %s70, %s72
    %p79 = scmp.eq.s32.totalorder %s20, 1
    %p80 = por %p78, %p79
    %p81 = scmp.ne.s32.totalorder %s72, %s73
    %p82 = scmp.eq.s32.totalorder %s20, 0
    %p83 = por %p81, %p82
    %p84 = scmp.ne.s32.totalorder %s72, %s73
    %p85 = scmp.eq.s32.totalorder %s21, 1
    %p86 = por %p84, %p85
    %p88 = scmp.ne.s32.totalorder %s73, %s87
    %p89 = scmp.eq.s32.totalorder %s21, 0
    %p90 = por %p88, %p89
    %s92 = sadd.s32 %s91, 1
    %p95 = scmp.eq.s32.totalorder %s15, 1
    %p96 = scmp.ne.s32.totalorder %s91, %s93
    %p97 = scmp.eq.s32.totalorder %s15, 0
    %p98 = por %p96, %p97
    %p99 = scmp.ne.s32.totalorder %s91, %s93
    %p100 = scmp.eq.s32.totalorder %s20, 1
    %p101 = por %p99, %p100
    %p102 = scmp.ne.s32.totalorder %s93, %s94
    %p103 = scmp.eq.s32.totalorder %s20, 0
    %p104 = por %p102, %p103
    %p105 = scmp.ne.s32.totalorder %s93, %s94
    %p106 = scmp.eq.s32.totalorder %s21, 1
    %p107 = por %p105, %p106
    %p109 = scmp.ne.s32.totalorder %s94, %s108
    %p110 = scmp.eq.s32.totalorder %s21, 0
    %p111 = por %p109, %p110
    %s113 = sadd.s32 %s112, 1
    %p116 = scmp.eq.s32.totalorder %s15, 1
    %p117 = scmp.ne.s32.totalorder %s112, %s114
    %p118 = scmp.eq.s32.totalorder %s15, 0
    %p119 = por %p117, %p118
    %p120 = scmp.ne.s32.totalorder %s112, %s114
    %p121 = scmp.eq.s32.totalorder %s20, 1
    %p122 = por %p120, %p121
    %p123 = scmp.ne.s32.totalorder %s114, %s115
    %p124 = scmp.eq.s32.totalorder %s20, 0
    %p125 = por %p123, %p124
    %p126 = scmp.ne.s32.totalorder %s114, %s115
    %p127 = scmp.eq.s32.totalorder %s21, 1
    %p128 = por %p126, %p127
    %p130 = scmp.ne.s32.totalorder %s115, %s129
    %p131 = scmp.eq.s32.totalorder %s21, 0
    %p132 = por %p130, %p131
    %s134 = sadd.s32 %s133, 1
    %p137 = scmp.eq.s32.totalorder %s15, 1
    %p138 = scmp.ne.s32.totalorder %s133, %s135
    %p139 = scmp.eq.s32.totalorder %s15, 0
    %p140 = por %p138, %p139
    %p141 = scmp.ne.s32.totalorder %s133, %s135
    %p142 = scmp.eq.s32.totalorder %s20, 1
    %p143 = por %p141, %p142
    %p144 = scmp.ne.s32.totalorder %s135, %s136
    %p145 = scmp.eq.s32.totalorder %s20, 0
    %p146 = por %p144, %p145
    %p147 = scmp.ne.s32.totalorder %s135, %s136
    %p148 = scmp.eq.s32.totalorder %s21, 1
    %p149 = por %p147, %p148
    %p151 = scmp.ne.s32.totalorder %s136, %s150
    %p152 = scmp.eq.s32.totalorder %s21, 0
    %p153 = por %p151, %p152
    %s155 = sadd.s32 %s154, 1
    %p158 = scmp.eq.s32.totalorder %s15, 1
    %p159 = scmp.ne.s32.totalorder %s154, %s156
    %p160 = scmp.eq.s32.totalorder %s15, 0
    %p161 = por %p159, %p160
    %p162 = scmp.ne.s32.totalorder %s154, %s156
    %p163 = scmp.eq.s32.totalorder %s20, 1
    %p164 = por %p162, %p163
    %p165 = scmp.ne.s32.totalorder %s156, %s157
    %p166 = scmp.eq.s32.totalorder %s20, 0
    %p167 = por %p165, %p166
    %p168 = scmp.ne.s32.totalorder %s156, %s157
    %p169 = scmp.eq.s32.totalorder %s21, 1
    %p170 = por %p168, %p169
    %p172 = scmp.ne.s32.totalorder %s157, %s171
    %p173 = scmp.eq.s32.totalorder %s21, 0
    %p174 = por %p172, %p173
    %s176 = sadd.s32 %s175, 1
    %p179 = scmp.eq.s32.totalorder %s15, 1
    %p180 = scmp.ne.s32.totalorder %s175, %s177
    %p181 = scmp.eq.s32.totalorder %s15, 0
    %p182 = por %p180, %p181
    %p183 = scmp.ne.s32.totalorder %s175, %s177
    %p184 = scmp.eq.s32.totalorder %s20, 1
    %p185 = por %p183, %p184
    %p186 = scmp.ne.s32.totalorder %s177, %s178
    %p187 = scmp.eq.s32.totalorder %s20, 0
    %p188 = por %p186, %p187
    %p189 = scmp.ne.s32.totalorder %s177, %s178
    %p190 = scmp.eq.s32.totalorder %s21, 1
    %p191 = por %p189, %p190
    %p193 = scmp.ne.s32.totalorder %s178, %s192
    %p194 = scmp.eq.s32.totalorder %s21, 0
    %p195 = por %p193, %p194
    %s197 = sadd.s32 %s196, 1
    %p200 = scmp.eq.s32.totalorder %s15, 1
    %p201 = scmp.ne.s32.totalorder %s196, %s198
    %p202 = scmp.eq.s32.totalorder %s15, 0
    %p203 = por %p201, %p202
    %p204 = scmp.ne.s32.totalorder %s196, %s198
    %p205 = scmp.eq.s32.totalorder %s20, 1
    %p206 = por %p204, %p205
    %p207 = scmp.ne.s32.totalorder %s198, %s199
    %p208 = scmp.eq.s32.totalorder %s20, 0
    %p209 = por %p207, %p208
    %p210 = scmp.ne.s32.totalorder %s198, %s199
    %p211 = scmp.eq.s32.totalorder %s21, 1
    %p212 = por %p210, %p211
    %p214 = scmp.ne.s32.totalorder %s199, %s213
    %p215 = scmp.eq.s32.totalorder %s21, 0
    %p216 = por %p214, %p215
    %s217 = ssub.s32 %s15, %s22
    %p218 = scmp.eq.s32.totalorder %s217, 0
    %s220 = sadd.s32 %s219, 1
    %s221 = scalar_select %p218, %s219, %s220
    %p224 = pneg %p218
    %p225 = scmp.eq.s32.totalorder %s15, 1
    %p226 = por %p224, %p225
    %p227 = scmp.ne.s32.totalorder %s219, %s222
    %p228 = scmp.eq.s32.totalorder %s15, 0
    %p229 = por %p227, %p228
    %p230 = scmp.ne.s32.totalorder %s219, %s222
    %p231 = scmp.eq.s32.totalorder %s20, 1
    %p232 = por %p230, %p231
    %p233 = scmp.ne.s32.totalorder %s222, %s223
    %p234 = scmp.eq.s32.totalorder %s20, 0
    %p235 = por %p233, %p234
    %p236 = scmp.ne.s32.totalorder %s222, %s223
    %p237 = scmp.eq.s32.totalorder %s21, 1
    %p238 = por %p236, %p237
    %p240 = scmp.ne.s32.totalorder %s223, %s239
    %p241 = scmp.eq.s32.totalorder %s21, 0
    %p242 = por %p240, %p241
    %p243 = scmp.le.s32.totalorder 1, %s15
    %p244 = scmp.lt.s32.totalorder %s15, 3
    %p245 = pnand %p243, %p244
    %p246 = pneg %p245
    // Predicated region
    $region9: #{crnet_forward.1} parent=5 // pred_check
      _
    $region10: #{crnet_forward.1} parent=5 // pred_check_branch
      %248 = sbr.rel (%p245) target = $region12
    $region11: #{crnet_forward.1} parent=5 // pred_region
      %s249 = ssub.s32 %s15, 1
      // Predicated region
      $region13: #{crnet_forward.1} parent=11 // pred_check
        %p250 = pneg %p62
      $region14: #{crnet_forward.1} parent=11 // pred_check_branch
        %252 = sbr.rel (%p250) target = $region16
      $region15: #{crnet_forward.1} parent=11 // pred_region
        _
      $region16: #{crnet_forward.1} parent=11 // pred_fallthru
        _
      // Predicated region
      $region17: #{crnet_forward.1} parent=11 // pred_check
        %p253 = pneg %p83
      $region18: #{crnet_forward.1} parent=11 // pred_check_branch
        %255 = sbr.rel (%p253) target = $region20
      $region19: #{crnet_forward.1} parent=11 // pred_region
        _
      $region20: #{crnet_forward.1} parent=11 // pred_fallthru
        _
      // Predicated region
      $region21: #{crnet_forward.1} parent=11 // pred_check
        %p256 = pneg %p104
      $region22: #{crnet_forward.1} parent=11 // pred_check_branch
        %258 = sbr.rel (%p256) target = $region24
      $region23: #{crnet_forward.1} parent=11 // pred_region
        _
      $region24: #{crnet_forward.1} parent=11 // pred_fallthru
        _
      // Predicated region
      $region25: #{crnet_forward.1} parent=11 // pred_check
        %p259 = pneg %p125
      $region26: #{crnet_forward.1} parent=11 // pred_check_branch
        %261 = sbr.rel (%p259) target = $region28
      $region27: #{crnet_forward.1} parent=11 // pred_region
        _
      $region28: #{crnet_forward.1} parent=11 // pred_fallthru
        _
      // Predicated region
      $region29: #{crnet_forward.1} parent=11 // pred_check
        %p262 = pneg %p146
      $region30: #{crnet_forward.1} parent=11 // pred_check_branch
        %264 = sbr.rel (%p262) target = $region32
      $region31: #{crnet_forward.1} parent=11 // pred_region
        _
      $region32: #{crnet_forward.1} parent=11 // pred_fallthru
        _
      // Predicated region
      $region33: #{crnet_forward.1} parent=11 // pred_check
        %p265 = pneg %p167
      $region34: #{crnet_forward.1} parent=11 // pred_check_branch
        %267 = sbr.rel (%p265) target = $region36
      $region35: #{crnet_forward.1} parent=11 // pred_region
        _
      $region36: #{crnet_forward.1} parent=11 // pred_fallthru
        _
      // Predicated region
      $region37: #{crnet_forward.1} parent=11 // pred_check
        %p268 = pneg %p188
      $region38: #{crnet_forward.1} parent=11 // pred_check_branch
        %270 = sbr.rel (%p268) target = $region40
      $region39: #{crnet_forward.1} parent=11 // pred_region
        _
      $region40: #{crnet_forward.1} parent=11 // pred_fallthru
        _
      // Predicated region
      $region41: #{crnet_forward.1} parent=11 // pred_check
        %p271 = pneg %p209
      $region42: #{crnet_forward.1} parent=11 // pred_check_branch
        %273 = sbr.rel (%p271) target = $region44
      $region43: #{crnet_forward.1} parent=11 // pred_region
        _
      $region44: #{crnet_forward.1} parent=11 // pred_fallthru
        _
    $region12: #{crnet_forward.1} parent=5 // pred_fallthru
      _
    %p274 = scmp.lt.s32.totalorder %s15, 2
    // Predicated region
    $region45: #{crnet_forward.1} parent=5 // pred_check
      %p275 = pneg %p274
    $region46: #{crnet_forward.1} parent=5 // pred_check_branch
      %277 = sbr.rel (%p275) target = $region48
    $region47: #{crnet_forward.1} parent=5 // pred_region
      // Predicated region
      $region49: #{crnet_forward.1} parent=47 // pred_check
        %p278 = pneg %p35
      $region50: #{crnet_forward.1} parent=47 // pred_check_branch
        %280 = sbr.rel (%p278) target = $region52
      $region51: #{crnet_forward.1} parent=47 // pred_region
        %p281 = scmp.lt.s32.totalorder %s15, 1
        %s282 = scalar_select %p281, %s15, 1
        %s283 = smul.addr %s282, 8
        %s284 = scalar_lea.vmem %s0, %s283
      $region52: #{crnet_forward.1} parent=47 // pred_fallthru
        _
    $region48: #{crnet_forward.1} parent=5 // pred_fallthru
      _
    %p285 = scmp.le.s32.totalorder 1, %s15
    %p286 = scmp.lt.s32.totalorder %s15, 3
    %p287 = pnand %p285, %p286
    %p288 = pneg %p287
    // Predicated region
    $region53: #{crnet_forward.1} parent=5 // pred_check
      _
    $region54: #{crnet_forward.1} parent=5 // pred_check_branch
      %290 = sbr.rel (%p287) target = $region56
    $region55: #{crnet_forward.1} parent=5 // pred_region
      %s291 = ssub.s32 %s15, 1
      %p292 = scmp.lt.s32.totalorder %s20, 1
      %s293 = scalar_select %p292, %s20, 1
      %s294 = smul.addr %s293, 8
      %s295 = scalar_lea.vmem %s0, %s294
      %p296 = pneg %p41
      %p297 = pneg %p38
      %p298 = pneg %p62
      %p299 = pneg %p59
      %p300 = pneg %p83
      %p301 = pneg %p80
      %p302 = pneg %p104
      %p303 = pneg %p101
      %p304 = pneg %p125
      %p305 = pneg %p122
      %p306 = pneg %p146
      %p307 = pneg %p143
      %p308 = pneg %p167
      %p309 = pneg %p164
      %p310 = pneg %p188
      %p311 = pneg %p185
      %p312 = pneg %p209
      %p313 = pneg %p206
      %p314 = pneg %p235
      %p315 = pneg %p232
      %p316 = scmp.lt.s32.totalorder %s20, 1
      %s317 = scalar_select %p316, %s20, 1
      %s318 = smul.addr %s317, 8
      %s319 = scalar_lea.vmem %s9, %s318
      %p320 = scmp.lt.s32.totalorder %s20, 1
      %s321 = scalar_select %p320, %s20, 1
      %s322 = smul.addr %s321, 8
      %s323 = scalar_lea.vmem %s0, %s322
      %p324 = scmp.lt.s32.totalorder %s20, 1
      %s325 = scalar_select %p324, %s20, 1
      %s326 = smul.addr %s325, 8
      %s327 = scalar_lea.vmem %s9, %s326
      %v328 = vld [vmem:[%s323] sm:$0xff]
      %v329 = vld [vmem:[%s1] sm:$0xff]
      %v330 = vld [vmem:[%s1 + $0x8] sm:$0xff]
      %v331 = vld [vmem:[%s1 + $0x10] sm:$0xff]
      %v332 = vld [vmem:[%s1 + $0x18] sm:$0xff]
      %v333 = vld [vmem:[%s1 + $0x20] sm:$0xf]
      %v334 = vld [vmem:[%s1 + $0x28] sm:$0xf]
      %v335 = vld [vmem:[%s2] sm:$0x3]
      %v337 = vlaneseq
      %v338 = vshrl.u32 %v337, 7
      %v339 = vsub.s32 0, %v338
      %v340 = vrot.slane %v335, %v339
      %v341 = vlaneseq
      %v342 = vshrl.u32 %v341, 7
      %v343 = vsub.s32 1, %v342
      %v344 = vrot.slane %v335, %v343
      %vm347 = vcmask 162816
      %v349 = vsel %vm347, %v328, 0
      %vm351 = vcmask 1043456
      %v353 = vsel %vm351, %v333, 0
      %v356 = vsel %vm351, %v334, 0
      %v358 = vand.u32 %v330, 4294901760
      %359 = vmatprep.subr.mxu0 %v358
      %v360 = vand.u32 %v329, 4294901760
      %361 = vmatpush1.msra.mxu0 %v360
      %v362 = vand.u32 %v332, 4294901760
      %363 = vmatprep.subr.mxu0 %v362
      %v364 = vand.u32 %v331, 4294901760
      %365 = vmatpush1.msra.mxu0 %v364
      %v366 = vand.u32 %v356, 4294901760
      %367 = vmatprep.subr.mxu0 %v366
      %v368 = vand.u32 %v353, 4294901760
      %369 = vmatpush1.msra.mxu0 %v368
      %370 = vmatprep.subr.mxu0 0.0
      %371 = vmatpush1.msra.mxu0 0.0
      %372 = vmatprep.subr.mxu0 0.0
      %373 = vmatpush1.msra.mxu0 0.0
      %374 = vmatprep.subr.mxu0 0.0
      %375 = vmatpush1.msra.mxu0 0.0
      %376 = vmatprep.subr.mxu0 0.0
      %377 = vmatpush1.msra.mxu0 0.0
      %378 = vmatprep.subr.mxu0 0.0
      %379 = vmatpush1.msra.mxu0 0.0
      %380 = vmatprep.subr.mxu0 0.0
      %381 = vmatpush1.msra.mxu0 0.0
      %382 = vmatprep.subr.mxu0 0.0
      %383 = vmatpush1.msra.mxu0 0.0
      %384 = vmatprep.subr.mxu0 0.0
      %385 = vmatpush1.msra.mxu0 0.0
      %386 = vmatprep.subr.mxu0 0.0
      %387 = vmatpush1.msra.mxu0 0.0
      %388 = vmatprep.subr.mxu0 0.0
      %389 = vmatpush1.msra.mxu0 0.0
      %390 = vmatprep.subr.mxu0 0.0
      %391 = vmatpush1.msra.mxu0 0.0
      %392 = vmatprep.subr.mxu0 0.0
      %393 = vmatpush1.msra.mxu0 0.0
      %394 = vmatprep.subr.mxu0 0.0
      %395 = vmatpush1.msra.mxu0 0.0
      %396 = vmatprep.subr.mxu0 0.0
      %397 = vmatpush1.msra.mxu0 0.0
      %398 = vmatprep.subr.mxu0 0.0
      %399 = vmatpush1.msra.mxu0 0.0
      %400 = vmatprep.subr.mxu0 0.0
      %401 = vmatpush1.msra.mxu0 0.0
      %402 = vmatprep.subr.mxu0 0.0
      %403 = vmatpush1.msra.mxu0 0.0
      %404 = vmatprep.subr.mxu0 0.0
      %405 = vmatpush1.msra.mxu0 0.0
      %406 = vmatprep.subr.mxu0 0.0
      %407 = vmatpush1.msra.mxu0 0.0
      %408 = vmatprep.subr.mxu0 0.0
      %409 = vmatpush1.msra.mxu0 0.0
      %410 = vmatprep.subr.mxu0 0.0
      %411 = vmatpush1.msra.mxu0 0.0
      %412 = vmatprep.subr.mxu0 0.0
      %413 = vmatpush1.msra.mxu0 0.0
      %414 = vmatprep.subr.mxu0 0.0
      %415 = vmatpush1.msra.mxu0 0.0
      %416 = vmatprep.subr.mxu0 0.0
      %417 = vmatpush1.msra.mxu0 0.0
      %418 = vmatprep.subr.mxu0 0.0
      %419 = vmatpush1.msra.mxu0 0.0
      %420 = vmatprep.subr.mxu0 0.0
      %421 = vmatpush1.msra.mxu0 0.0
      %422 = vmatprep.subr.mxu0 0.0
      %423 = vmatpush1.msra.mxu0 0.0
      %424 = vmatprep.subr.mxu0 0.0
      %425 = vmatpush1.msra.mxu0 0.0
      %426 = vmatprep.subr.mxu0 0.0
      %427 = vmatpush1.msra.mxu0 0.0
      %428 = vmatprep.mubr.f32.mxu0 0.0
      %v429 = vand.u32 %v349, 4294901760
      %v430 = vsub.f32 %v349, %v429
      %v431 = vand.u32 %v430, 4294901760
      %v432 = vsub.f32 %v430, %v431
      %v433 = vand.u32 %v432, 4294901760
      %434 = vmatmul.mubr.f32.gmra.mrb[0].mxu0 %v433
      %v435 = vpop.f32.mrb[0].mxu0
      %v436 = vadd.f32 %v340, %v435
      %v437 = vpop.f32.mrb[0].mxu0
      %v438 = vadd.f32 %v344, %v437
      %439 = vdwg.mxu0
      %v440 = vand.u32 %v330, 4294901760
      %v441 = vsub.f32 %v330, %v440
      %v442 = vand.u32 %v441, 4294901760
      %v443 = vsub.f32 %v441, %v442
      %v444 = vand.u32 %v443, 4294901760
      %445 = vmatprep.subr.mxu0 %v444
      %v446 = vand.u32 %v329, 4294901760
      %v447 = vsub.f32 %v329, %v446
      %v448 = vand.u32 %v447, 4294901760
      %v449 = vsub.f32 %v447, %v448
      %v450 = vand.u32 %v449, 4294901760
      %451 = vmatpush1.msra.mxu0 %v450
      %v452 = vand.u32 %v332, 4294901760
      %v453 = vsub.f32 %v332, %v452
      %v454 = vand.u32 %v453, 4294901760
      %v455 = vsub.f32 %v453, %v454
      %v456 = vand.u32 %v455, 4294901760
      %457 = vmatprep.subr.mxu0 %v456
      %v458 = vand.u32 %v331, 4294901760
      %v459 = vsub.f32 %v331, %v458
      %v460 = vand.u32 %v459, 4294901760
      %v461 = vsub.f32 %v459, %v460
      %v462 = vand.u32 %v461, 4294901760
      %463 = vmatpush1.msra.mxu0 %v462
      %v464 = vand.u32 %v356, 4294901760
      %v465 = vsub.f32 %v356, %v464
      %v466 = vand.u32 %v465, 4294901760
      %v467 = vsub.f32 %v465, %v466
      %v468 = vand.u32 %v467, 4294901760
      %469 = vmatprep.subr.mxu0 %v468
      %v470 = vand.u32 %v353, 4294901760
      %v471 = vsub.f32 %v353, %v470
      %v472 = vand.u32 %v471, 4294901760
      %v473 = vsub.f32 %v471, %v472
      %v474 = vand.u32 %v473, 4294901760
      %475 = vmatpush1.msra.mxu0 %v474
      %476 = vmatprep.subr.mxu0 0.0
      %477 = vmatpush1.msra.mxu0 0.0
      %478 = vmatprep.subr.mxu0 0.0
      %479 = vmatpush1.msra.mxu0 0.0
      %480 = vmatprep.subr.mxu0 0.0
      %481 = vmatpush1.msra.mxu0 0.0
      %482 = vmatprep.subr.mxu0 0.0
      %483 = vmatpush1.msra.mxu0 0.0
      %484 = vmatprep.subr.mxu0 0.0
      %485 = vmatpush1.msra.mxu0 0.0
      %486 = vmatprep.subr.mxu0 0.0
      %487 = vmatpush1.msra.mxu0 0.0
      %488 = vmatprep.subr.mxu0 0.0
      %489 = vmatpush1.msra.mxu0 0.0
      %490 = vmatprep.subr.mxu0 0.0
      %491 = vmatpush1.msra.mxu0 0.0
      %492 = vmatprep.subr.mxu0 0.0
      %493 = vmatpush1.msra.mxu0 0.0
      %494 = vmatprep.subr.mxu0 0.0
      %495 = vmatpush1.msra.mxu0 0.0
      %496 = vmatprep.subr.mxu0 0.0
      %497 = vmatpush1.msra.mxu0 0.0
      %498 = vmatprep.subr.mxu0 0.0
      %499 = vmatpush1.msra.mxu0 0.0
      %500 = vmatprep.subr.mxu0 0.0
      %501 = vmatpush1.msra.mxu0 0.0
      %502 = vmatprep.subr.mxu0 0.0
      %503 = vmatpush1.msra.mxu0 0.0
      %504 = vmatprep.subr.mxu0 0.0
      %505 = vmatpush1.msra.mxu0 0.0
      %506 = vmatprep.subr.mxu0 0.0
      %507 = vmatpush1.msra.mxu0 0.0
      %508 = vmatprep.subr.mxu0 0.0
      %509 = vmatpush1.msra.mxu0 0.0
      %510 = vmatprep.subr.mxu0 0.0
      %511 = vmatpush1.msra.mxu0 0.0
      %512 = vmatprep.subr.mxu0 0.0
      %513 = vmatpush1.msra.mxu0 0.0
      %514 = vmatprep.subr.mxu0 0.0
      %515 = vmatpush1.msra.mxu0 0.0
      %516 = vmatprep.subr.mxu0 0.0
      %517 = vmatpush1.msra.mxu0 0.0
      %518 = vmatprep.subr.mxu0 0.0
      %519 = vmatpush1.msra.mxu0 0.0
      %520 = vmatprep.subr.mxu0 0.0
      %521 = vmatpush1.msra.mxu0 0.0
      %522 = vmatprep.subr.mxu0 0.0
      %523 = vmatpush1.msra.mxu0 0.0
      %524 = vmatprep.subr.mxu0 0.0
      %525 = vmatpush1.msra.mxu0 0.0
      %526 = vmatprep.subr.mxu0 0.0
      %527 = vmatpush1.msra.mxu0 0.0
      %528 = vmatprep.subr.mxu0 0.0
      %529 = vmatpush1.msra.mxu0 0.0
      %530 = vmatprep.subr.mxu0 0.0
      %531 = vmatpush1.msra.mxu0 0.0
      %532 = vmatprep.subr.mxu0 0.0
      %533 = vmatpush1.msra.mxu0 0.0
      %534 = vmatprep.mubr.f32.mxu0 0.0
      %v535 = vand.u32 %v349, 4294901760
      %536 = vmatmul.mubr.f32.gmra.mrb[0].mxu0 %v535
      %v537 = vpop.f32.mrb[0].mxu0
      %v538 = vadd.f32 %v436, %v537
      %v539 = vpop.f32.mrb[0].mxu0
      %v540 = vadd.f32 %v438, %v539
      %541 = vdwg.mxu0
      %v542 = vand.u32 %v330, 4294901760
      %v543 = vsub.f32 %v330, %v542
      %544 = vmatprep.subr.mxu0 %v543
      %v545 = vand.u32 %v329, 4294901760
      %v546 = vsub.f32 %v329, %v545
      %547 = vmatpush1.msra.mxu0 %v546
      %v548 = vand.u32 %v332, 4294901760
      %v549 = vsub.f32 %v332, %v548
      %550 = vmatprep.subr.mxu0 %v549
      %v551 = vand.u32 %v331, 4294901760
      %v552 = vsub.f32 %v331, %v551
      %553 = vmatpush1.msra.mxu0 %v552
      %v554 = vand.u32 %v356, 4294901760
      %v555 = vsub.f32 %v356, %v554
      %556 = vmatprep.subr.mxu0 %v555
      %v557 = vand.u32 %v353, 4294901760
      %v558 = vsub.f32 %v353, %v557
      %559 = vmatpush1.msra.mxu0 %v558
      %560 = vmatprep.subr.mxu0 0.0
      %561 = vmatpush1.msra.mxu0 0.0
      %562 = vmatprep.subr.mxu0 0.0
      %563 = vmatpush1.msra.mxu0 0.0
      %564 = vmatprep.subr.mxu0 0.0
      %565 = vmatpush1.msra.mxu0 0.0
      %566 = vmatprep.subr.mxu0 0.0
      %567 = vmatpush1.msra.mxu0 0.0
      %568 = vmatprep.subr.mxu0 0.0
      %569 = vmatpush1.msra.mxu0 0.0
      %570 = vmatprep.subr.mxu0 0.0
      %571 = vmatpush1.msra.mxu0 0.0
      %572 = vmatprep.subr.mxu0 0.0
      %573 = vmatpush1.msra.mxu0 0.0
      %574 = vmatprep.subr.mxu0 0.0
      %575 = vmatpush1.msra.mxu0 0.0
      %576 = vmatprep.subr.mxu0 0.0
      %577 = vmatpush1.msra.mxu0 0.0
      %578 = vmatprep.subr.mxu0 0.0
      %579 = vmatpush1.msra.mxu0 0.0
      %580 = vmatprep.subr.mxu0 0.0
      %581 = vmatpush1.msra.mxu0 0.0
      %582 = vmatprep.subr.mxu0 0.0
      %583 = vmatpush1.msra.mxu0 0.0
      %584 = vmatprep.subr.mxu0 0.0
      %585 = vmatpush1.msra.mxu0 0.0
      %586 = vmatprep.subr.mxu0 0.0
      %587 = vmatpush1.msra.mxu0 0.0
      %588 = vmatprep.subr.mxu0 0.0
      %589 = vmatpush1.msra.mxu0 0.0
      %590 = vmatprep.subr.mxu0 0.0
      %591 = vmatpush1.msra.mxu0 0.0
      %592 = vmatprep.subr.mxu0 0.0
      %593 = vmatpush1.msra.mxu0 0.0
      %594 = vmatprep.subr.mxu0 0.0
      %595 = vmatpush1.msra.mxu0 0.0
      %596 = vmatprep.subr.mxu0 0.0
      %597 = vmatpush1.msra.mxu0 0.0
      %598 = vmatprep.subr.mxu0 0.0
      %599 = vmatpush1.msra.mxu0 0.0
      %600 = vmatprep.subr.mxu0 0.0
      %601 = vmatpush1.msra.mxu0 0.0
      %602 = vmatprep.subr.mxu0 0.0
      %603 = vmatpush1.msra.mxu0 0.0
      %604 = vmatprep.subr.mxu0 0.0
      %605 = vmatpush1.msra.mxu0 0.0
      %606 = vmatprep.subr.mxu0 0.0
      %607 = vmatpush1.msra.mxu0 0.0
      %608 = vmatprep.subr.mxu0 0.0
      %609 = vmatpush1.msra.mxu0 0.0
      %610 = vmatprep.subr.mxu0 0.0
      %611 = vmatpush1.msra.mxu0 0.0
      %612 = vmatprep.subr.mxu0 0.0
      %613 = vmatpush1.msra.mxu0 0.0
      %614 = vmatprep.subr.mxu0 0.0
      %615 = vmatpush1.msra.mxu0 0.0
      %616 = vmatprep.subr.mxu0 0.0
      %617 = vmatpush1.msra.mxu0 0.0
      %618 = vmatprep.mubr.f32.mxu0 0.0
      %v619 = vand.u32 %v349, 4294901760
      %v620 = vsub.f32 %v349, %v619
      %621 = vmatmul.mubr.f32.gmra.mrb[0].mxu0 %v620
      %v622 = vpop.f32.mrb[0].mxu0
      %v623 = vadd.f32 %v538, %v622
      %v624 = vpop.f32.mrb[0].mxu0
      %v625 = vadd.f32 %v540, %v624
      %626 = vdwg.mxu0
      %v627 = vand.u32 %v330, 4294901760
      %628 = vmatprep.subr.mxu0 %v627
      %v629 = vand.u32 %v329, 4294901760
      %630 = vmatpush1.msra.mxu0 %v629
      %v631 = vand.u32 %v332, 4294901760
      %632 = vmatprep.subr.mxu0 %v631
      %v633 = vand.u32 %v331, 4294901760
      %634 = vmatpush1.msra.mxu0 %v633
      %v635 = vand.u32 %v356, 4294901760
      %636 = vmatprep.subr.mxu0 %v635
      %v637 = vand.u32 %v353, 4294901760
      %638 = vmatpush1.msra.mxu0 %v637
      %639 = vmatprep.subr.mxu0 0.0
      %640 = vmatpush1.msra.mxu0 0.0
      %641 = vmatprep.subr.mxu0 0.0
      %642 = vmatpush1.msra.mxu0 0.0
      %643 = vmatprep.subr.mxu0 0.0
      %644 = vmatpush1.msra.mxu0 0.0
      %645 = vmatprep.subr.mxu0 0.0
      %646 = vmatpush1.msra.mxu0 0.0
      %647 = vmatprep.subr.mxu0 0.0
      %648 = vmatpush1.msra.mxu0 0.0
      %649 = vmatprep.subr.mxu0 0.0
      %650 = vmatpush1.msra.mxu0 0.0
      %651 = vmatprep.subr.mxu0 0.0
      %652 = vmatpush1.msra.mxu0 0.0
      %653 = vmatprep.subr.mxu0 0.0
      %654 = vmatpush1.msra.mxu0 0.0
      %655 = vmatprep.subr.mxu0 0.0
      %656 = vmatpush1.msra.mxu0 0.0
      %657 = vmatprep.subr.mxu0 0.0
      %658 = vmatpush1.msra.mxu0 0.0
      %659 = vmatprep.subr.mxu0 0.0
      %660 = vmatpush1.msra.mxu0 0.0
      %661 = vmatprep.subr.mxu0 0.0
      %662 = vmatpush1.msra.mxu0 0.0
      %663 = vmatprep.subr.mxu0 0.0
      %664 = vmatpush1.msra.mxu0 0.0
      %665 = vmatprep.subr.mxu0 0.0
      %666 = vmatpush1.msra.mxu0 0.0
      %667 = vmatprep.subr.mxu0 0.0
      %668 = vmatpush1.msra.mxu0 0.0
      %669 = vmatprep.subr.mxu0 0.0
      %670 = vmatpush1.msra.mxu0 0.0
      %671 = vmatprep.subr.mxu0 0.0
      %672 = vmatpush1.msra.mxu0 0.0
      %673 = vmatprep.subr.mxu0 0.0
      %674 = vmatpush1.msra.mxu0 0.0
      %675 = vmatprep.subr.mxu0 0.0
      %676 = vmatpush1.msra.mxu0 0.0
      %677 = vmatprep.subr.mxu0 0.0
      %678 = vmatpush1.msra.mxu0 0.0
      %679 = vmatprep.subr.mxu0 0.0
      %680 = vmatpush1.msra.mxu0 0.0
      %681 = vmatprep.subr.mxu0 0.0
      %682 = vmatpush1.msra.mxu0 0.0
      %683 = vmatprep.subr.mxu0 0.0
      %684 = vmatpush1.msra.mxu0 0.0
      %685 = vmatprep.subr.mxu0 0.0
      %686 = vmatpush1.msra.mxu0 0.0
      %687 = vmatprep.subr.mxu0 0.0
      %688 = vmatpush1.msra.mxu0 0.0
      %689 = vmatprep.subr.mxu0 0.0
      %690 = vmatpush1.msra.mxu0 0.0
      %691 = vmatprep.subr.mxu0 0.0
      %692 = vmatpush1.msra.mxu0 0.0
      %693 = vmatprep.subr.mxu0 0.0
      %694 = vmatpush1.msra.mxu0 0.0
      %695 = vmatprep.subr.mxu0 0.0
      %696 = vmatpush1.msra.mxu0 0.0
      %697 = vmatprep.mubr.f32.mxu0 0.0
      %v698 = vand.u32 %v349, 4294901760
      %v699 = vsub.f32 %v349, %v698
      %v700 = vand.u32 %v699, 4294901760
      %701 = vmatmul.mubr.f32.gmra.mrb[0].mxu0 %v700
      %v702 = vpop.f32.mrb[0].mxu0
      %v703 = vadd.f32 %v623, %v702
      %v704 = vpop.f32.mrb[0].mxu0
      %v705 = vadd.f32 %v625, %v704
      %706 = vdwg.mxu0
      %v707 = vand.u32 %v330, 4294901760
      %v708 = vsub.f32 %v330, %v707
      %v709 = vand.u32 %v708, 4294901760
      %710 = vmatprep.subr.mxu0 %v709
      %v711 = vand.u32 %v329, 4294901760
      %v712 = vsub.f32 %v329, %v711
      %v713 = vand.u32 %v712, 4294901760
      %714 = vmatpush1.msra.mxu0 %v713
      %v715 = vand.u32 %v332, 4294901760
      %v716 = vsub.f32 %v332, %v715
      %v717 = vand.u32 %v716, 4294901760
      %718 = vmatprep.subr.mxu0 %v717
      %v719 = vand.u32 %v331, 4294901760
      %v720 = vsub.f32 %v331, %v719
      %v721 = vand.u32 %v720, 4294901760
      %722 = vmatpush1.msra.mxu0 %v721
      %v723 = vand.u32 %v356, 4294901760
      %v724 = vsub.f32 %v356, %v723
      %v725 = vand.u32 %v724, 4294901760
      %726 = vmatprep.subr.mxu0 %v725
      %v727 = vand.u32 %v353, 4294901760
      %v728 = vsub.f32 %v353, %v727
      %v729 = vand.u32 %v728, 4294901760
      %730 = vmatpush1.msra.mxu0 %v729
      %731 = vmatprep.subr.mxu0 0.0
      %732 = vmatpush1.msra.mxu0 0.0
      %733 = vmatprep.subr.mxu0 0.0
      %734 = vmatpush1.msra.mxu0 0.0
      %735 = vmatprep.subr.mxu0 0.0
      %736 = vmatpush1.msra.mxu0 0.0
      %737 = vmatprep.subr.mxu0 0.0
      %738 = vmatpush1.msra.mxu0 0.0
      %739 = vmatprep.subr.mxu0 0.0
      %740 = vmatpush1.msra.mxu0 0.0
      %741 = vmatprep.subr.mxu0 0.0
      %742 = vmatpush1.msra.mxu0 0.0
      %743 = vmatprep.subr.mxu0 0.0
      %744 = vmatpush1.msra.mxu0 0.0
      %745 = vmatprep.subr.mxu0 0.0
      %746 = vmatpush1.msra.mxu0 0.0
      %747 = vmatprep.subr.mxu0 0.0
      %748 = vmatpush1.msra.mxu0 0.0
      %749 = vmatprep.subr.mxu0 0.0
      %750 = vmatpush1.msra.mxu0 0.0
      %751 = vmatprep.subr.mxu0 0.0
      %752 = vmatpush1.msra.mxu0 0.0
      %753 = vmatprep.subr.mxu0 0.0
      %754 = vmatpush1.msra.mxu0 0.0
      %755 = vmatprep.subr.mxu0 0.0
      %756 = vmatpush1.msra.mxu0 0.0
      %757 = vmatprep.subr.mxu0 0.0
      %758 = vmatpush1.msra.mxu0 0.0
      %759 = vmatprep.subr.mxu0 0.0
      %760 = vmatpush1.msra.mxu0 0.0
      %761 = vmatprep.subr.mxu0 0.0
      %762 = vmatpush1.msra.mxu0 0.0
      %763 = vmatprep.subr.mxu0 0.0
      %764 = vmatpush1.msra.mxu0 0.0
      %765 = vmatprep.subr.mxu0 0.0
      %766 = vmatpush1.msra.mxu0 0.0
      %767 = vmatprep.subr.mxu0 0.0
      %768 = vmatpush1.msra.mxu0 0.0
      %769 = vmatprep.subr.mxu0 0.0
      %770 = vmatpush1.msra.mxu0 0.0
      %771 = vmatprep.subr.mxu0 0.0
      %772 = vmatpush1.msra.mxu0 0.0
      %773 = vmatprep.subr.mxu0 0.0
      %774 = vmatpush1.msra.mxu0 0.0
      %775 = vmatprep.subr.mxu0 0.0
      %776 = vmatpush1.msra.mxu0 0.0
      %777 = vmatprep.subr.mxu0 0.0
      %778 = vmatpush1.msra.mxu0 0.0
      %779 = vmatprep.subr.mxu0 0.0
      %780 = vmatpush1.msra.mxu0 0.0
      %781 = vmatprep.subr.mxu0 0.0
      %782 = vmatpush1.msra.mxu0 0.0
      %783 = vmatprep.subr.mxu0 0.0
      %784 = vmatpush1.msra.mxu0 0.0
      %785 = vmatprep.subr.mxu0 0.0
      %786 = vmatpush1.msra.mxu0 0.0
      %787 = vmatprep.subr.mxu0 0.0
      %788 = vmatpush1.msra.mxu0 0.0
      %789 = vmatprep.mubr.f32.mxu0 0.0
      %v790 = vand.u32 %v349, 4294901760
      %791 = vmatmul.mubr.f32.gmra.mrb[0].mxu0 %v790
      %v792 = vpop.f32.mrb[0].mxu0
      %v793 = vadd.f32 %v703, %v792
      %v794 = vpop.f32.mrb[0].mxu0
      %v795 = vadd.f32 %v705, %v794
      %796 = vdwg.mxu0
      %v797 = vand.u32 %v330, 4294901760
      %798 = vmatprep.subr.mxu0 %v797
      %v799 = vand.u32 %v329, 4294901760
      %800 = vmatpush1.msra.mxu0 %v799
      %v801 = vand.u32 %v332, 4294901760
      %802 = vmatprep.subr.mxu0 %v801
      %v803 = vand.u32 %v331, 4294901760
      %804 = vmatpush1.msra.mxu0 %v803
      %v805 = vand.u32 %v356, 4294901760
      %806 = vmatprep.subr.mxu0 %v805
      %v807 = vand.u32 %v353, 4294901760
      %808 = vmatpush1.msra.mxu0 %v807
      %809 = vmatprep.subr.mxu0 0.0
      %810 = vmatpush1.msra.mxu0 0.0
      %811 = vmatprep.subr.mxu0 0.0
      %812 = vmatpush1.msra.mxu0 0.0
      %813 = vmatprep.subr.mxu0 0.0
      %814 = vmatpush1.msra.mxu0 0.0
      %815 = vmatprep.subr.mxu0 0.0
      %816 = vmatpush1.msra.mxu0 0.0
      %817 = vmatprep.subr.mxu0 0.0
      %818 = vmatpush1.msra.mxu0 0.0
      %819 = vmatprep.subr.mxu0 0.0
      %820 = vmatpush1.msra.mxu0 0.0
      %821 = vmatprep.subr.mxu0 0.0
      %822 = vmatpush1.msra.mxu0 0.0
      %823 = vmatprep.subr.mxu0 0.0
      %824 = vmatpush1.msra.mxu0 0.0
      %825 = vmatprep.subr.mxu0 0.0
      %826 = vmatpush1.msra.mxu0 0.0
      %827 = vmatprep.subr.mxu0 0.0
      %828 = vmatpush1.msra.mxu0 0.0
      %829 = vmatprep.subr.mxu0 0.0
      %830 = vmatpush1.msra.mxu0 0.0
      %831 = vmatprep.subr.mxu0 0.0
      %832 = vmatpush1.msra.mxu0 0.0
      %833 = vmatprep.subr.mxu0 0.0
      %834 = vmatpush1.msra.mxu0 0.0
      %835 = vmatprep.subr.mxu0 0.0
      %836 = vmatpush1.msra.mxu0 0.0
      %837 = vmatprep.subr.mxu0 0.0
      %838 = vmatpush1.msra.mxu0 0.0
      %839 = vmatprep.subr.mxu0 0.0
      %840 = vmatpush1.msra.mxu0 0.0
      %841 = vmatprep.subr.mxu0 0.0
      %842 = vmatpush1.msra.mxu0 0.0
      %843 = vmatprep.subr.mxu0 0.0
      %844 = vmatpush1.msra.mxu0 0.0
      %845 = vmatprep.subr.mxu0 0.0
      %846 = vmatpush1.msra.mxu0 0.0
      %847 = vmatprep.subr.mxu0 0.0
      %848 = vmatpush1.msra.mxu0 0.0
      %849 = vmatprep.subr.mxu0 0.0
      %850 = vmatpush1.msra.mxu0 0.0
      %851 = vmatprep.subr.mxu0 0.0
      %852 = vmatpush1.msra.mxu0 0.0
      %853 = vmatprep.subr.mxu0 0.0
      %854 = vmatpush1.msra.mxu0 0.0
      %855 = vmatprep.subr.mxu0 0.0
      %856 = vmatpush1.msra.mxu0 0.0
      %857 = vmatprep.subr.mxu0 0.0
      %858 = vmatpush1.msra.mxu0 0.0
      %859 = vmatprep.subr.mxu0 0.0
      %860 = vmatpush1.msra.mxu0 0.0
      %861 = vmatprep.subr.mxu0 0.0
      %862 = vmatpush1.msra.mxu0 0.0
      %863 = vmatprep.subr.mxu0 0.0
      %864 = vmatpush1.msra.mxu0 0.0
      %865 = vmatprep.subr.mxu0 0.0
      %866 = vmatpush1.msra.mxu0 0.0
      %867 = vmatprep.mubr.f32.mxu0 0.0
      %v868 = vand.u32 %v349, 4294901760
      %869 = vmatmul.mubr.f32.gmra.mrb[0].mxu0 %v868
      %v870 = vpop.f32.mrb[0].mxu0
      %v871 = vadd.f32 %v793, %v870
      %v872 = vpop.f32.mrb[0].mxu0
      %v873 = vadd.f32 %v795, %v872
      %874 = vdwg.mxu0
      %vm875 = vcmp.ge.f32.partialorder %v871, 0.0
      %vm876 = vcmp.ge.f32.partialorder %v873, 0.0
      %v877 = vmul.f32 %v871, 0.01
      %v878 = vmul.f32 %v873, 0.01
      %v879 = vsel %vm875, %v871, %v877
      %v880 = vsel %vm876, %v873, %v878
      %v881 = vld [vmem:[%s3] sm:$0xff]
      %v882 = vld [vmem:[%s3 + $0x8] sm:$0xff]
      %v883 = vld [vmem:[%s3 + $0x10] sm:$0xff]
      %v884 = vld [vmem:[%s3 + $0x18] sm:$0xff]
      %v885 = vld [vmem:[%s3 + $0x20] sm:$0xff]
      %v886 = vld [vmem:[%s3 + $0x28] sm:$0xff]
      %v887 = vld [vmem:[%s3 + $0x30] sm:$0xff]
      %v888 = vld [vmem:[%s3 + $0x38] sm:$0xff]
      %v889 = vld [vmem:[%s3 + $0x40] sm:$0xff]
      %v890 = vld [vmem:[%s3 + $0x48] sm:$0xff]
      %v891 = vld [vmem:[%s3 + $0x50] sm:$0xff]
      %v892 = vld [vmem:[%s3 + $0x58] sm:$0xff]
      %v893 = vld [vmem:[%s3 + $0x60] sm:$0xff]
      %v894 = vld [vmem:[%s3 + $0x68] sm:$0xff]
      %v895 = vld [vmem:[%s3 + $0x70] sm:$0xff]
      %v896 = vld [vmem:[%s3 + $0x78] sm:$0xff]
      %v897 = vld [vmem:[%s3 + $0x80] sm:$0xff]
      %v898 = vld [vmem:[%s3 + $0x88] sm:$0xff]
      %v899 = vld [vmem:[%s3 + $0x90] sm:$0xff]
      %v900 = vld [vmem:[%s3 + $0x98] sm:$0xff]
      %v901 = vld [vmem:[%s3 + $0xa0] sm:$0xff]
      %v902 = vld [vmem:[%s3 + $0xa8] sm:$0xff]
      %v903 = vld [vmem:[%s3 + $0xb0] sm:$0xff]
      %v904 = vld [vmem:[%s3 + $0xb8] sm:$0xff]
      %v905 = vld [vmem:[%s3 + $0xc0] sm:$0xff]
      %v906 = vld [vmem:[%s3 + $0xc8] sm:$0xff]
      %v907 = vld [vmem:[%s3 + $0xd0] sm:$0xff]
      %v908 = vld [vmem:[%s3 + $0xd8] sm:$0xff]
      %v909 = vld [vmem:[%s3 + $0xe0] sm:$0xff]
      %v910 = vld [vmem:[%s3 + $0xe8] sm:$0xff]
      %v911 = vld [vmem:[%s3 + $0xf0] sm:$0xff]
      %v912 = vld [vmem:[%s3 + $0xf8] sm:$0xff]
      %v913 = vld [vmem:[%s4] sm:$0x1]
      %v915 = vlaneseq
      %v916 = vshrl.u32 %v915, 7
      %v917 = vsub.s32 0, %v916
      %v918 = vrot.slane %v913, %v917
      %920 = vmatprep.subr.mxu0 0.0
      %v921 = vand.u32 %v881, 4294901760
      %922 = vmatpush1.msra.mxu0 %v921
      %923 = vmatprep.subr.mxu0 0.0
      %v924 = vand.u32 %v882, 4294901760
      %925 = vmatpush1.msra.mxu0 %v924
      %926 = vmatprep.subr.mxu0 0.0
      %v927 = vand.u32 %v883, 4294901760
      %928 = vmatpush1.msra.mxu0 %v927
      %929 = vmatprep.subr.mxu0 0.0
      %v930 = vand.u32 %v884, 4294901760
      %931 = vmatpush1.msra.mxu0 %v930
      %932 = vmatprep.subr.mxu0 0.0
      %v933 = vand.u32 %v885, 4294901760
      %934 = vmatpush1.msra.mxu0 %v933
      %935 = vmatprep.subr.mxu0 0.0
      %v936 = vand.u32 %v886, 4294901760
      %937 = vmatpush1.msra.mxu0 %v936
      %938 = vmatprep.subr.mxu0 0.0
      %v939 = vand.u32 %v887, 4294901760
      %940 = vmatpush1.msra.mxu0 %v939
      %941 = vmatprep.subr.mxu0 0.0
      %v942 = vand.u32 %v888, 4294901760
      %943 = vmatpush1.msra.mxu0 %v942
      %944 = vmatprep.subr.mxu0 0.0
      %v945 = vand.u32 %v889, 4294901760
      %946 = vmatpush1.msra.mxu0 %v945
      %947 = vmatprep.subr.mxu0 0.0
      %v948 = vand.u32 %v890, 4294901760
      %949 = vmatpush1.msra.mxu0 %v948
      %950 = vmatprep.subr.mxu0 0.0
      %v951 = vand.u32 %v891, 4294901760
      %952 = vmatpush1.msra.mxu0 %v951
      %953 = vmatprep.subr.mxu0 0.0
      %v954 = vand.u32 %v892, 4294901760
      %955 = vmatpush1.msra.mxu0 %v954
      %956 = vmatprep.subr.mxu0 0.0
      %v957 = vand.u32 %v893, 4294901760
      %958 = vmatpush1.msra.mxu0 %v957
      %959 = vmatprep.subr.mxu0 0.0
      %v960 = vand.u32 %v894, 4294901760
      %961 = vmatpush1.msra.mxu0 %v960
      %962 = vmatprep.subr.mxu0 0.0
      %v963 = vand.u32 %v895, 4294901760
      %964 = vmatpush1.msra.mxu0 %v963
      %965 = vmatprep.subr.mxu0 0.0
      %v966 = vand.u32 %v896, 4294901760
      %967 = vmatpush1.msra.mxu0 %v966
      %968 = vmatprep.subr.mxu0 0.0
      %v969 = vand.u32 %v897, 4294901760
      %970 = vmatpush1.msra.mxu0 %v969
      %971 = vmatprep.subr.mxu0 0.0
      %v972 = vand.u32 %v898, 4294901760
      %973 = vmatpush1.msra.mxu0 %v972
      %974 = vmatprep.subr.mxu0 0.0
      %v975 = vand.u32 %v899, 4294901760
      %976 = vmatpush1.msra.mxu0 %v975
      %977 = vmatprep.subr.mxu0 0.0
      %v978 = vand.u32 %v900, 4294901760
      %979 = vmatpush1.msra.mxu0 %v978
      %980 = vmatprep.subr.mxu0 0.0
      %v981 = vand.u32 %v901, 4294901760
      %982 = vmatpush1.msra.mxu0 %v981
      %983 = vmatprep.subr.mxu0 0.0
      %v984 = vand.u32 %v902, 4294901760
      %985 = vmatpush1.msra.mxu0 %v984
      %986 = vmatprep.subr.mxu0 0.0
      %v987 = vand.u32 %v903, 4294901760
      %988 = vmatpush1.msra.mxu0 %v987
      %989 = vmatprep.subr.mxu0 0.0
      %v990 = vand.u32 %v904, 4294901760
      %991 = vmatpush1.msra.mxu0 %v990
      %992 = vmatprep.subr.mxu0 0.0
      %v993 = vand.u32 %v905, 4294901760
      %994 = vmatpush1.msra.mxu0 %v993
      %995 = vmatprep.subr.mxu0 0.0
      %v996 = vand.u32 %v906, 4294901760
      %997 = vmatpush1.msra.mxu0 %v996
      %998 = vmatprep.subr.mxu0 0.0
      %v999 = vand.u32 %v907, 4294901760
      %1000 = vmatpush1.msra.mxu0 %v999
      %1001 = vmatprep.subr.mxu0 0.0
      %v1002 = vand.u32 %v908, 4294901760
      %1003 = vmatpush1.msra.mxu0 %v1002
      %1004 = vmatprep.subr.mxu0 0.0
      %v1005 = vand.u32 %v909, 4294901760
      %1006 = vmatpush1.msra.mxu0 %v1005
      %1007 = vmatprep.subr.mxu0 0.0
      %v1008 = vand.u32 %v910, 4294901760
      %1009 = vmatpush1.msra.mxu0 %v1008
      %1010 = vmatprep.subr.mxu0 0.0
      %v1011 = vand.u32 %v911, 4294901760
      %1012 = vmatpush1.msra.mxu0 %v1011
      %1013 = vmatprep.subr.mxu0 0.0
      %v1014 = vand.u32 %v912, 4294901760
      %1015 = vmatpush1.msra.mxu0 %v1014
      %v1016 = vand.u32 %v880, 4294901760
      %v1017 = vsub.f32 %v880, %v1016
      %v1018 = vand.u32 %v1017, 4294901760
      %v1019 = vsub.f32 %v1017, %v1018
      %v1020 = vand.u32 %v1019, 4294901760
      %1021 = vmatprep.mubr.f32.mxu0 %v1020
      %v1022 = vand.u32 %v879, 4294901760
      %v1023 = vsub.f32 %v879, %v1022
      %v1024 = vand.u32 %v1023, 4294901760
      %v1025 = vsub.f32 %v1023, %v1024
      %v1026 = vand.u32 %v1025, 4294901760
      %1027 = vmatmul.mubr.f32.gmra.mrb[0].mxu0 %v1026
      %v1028 = vpop.f32.mrb[0].mxu0
      %v1029 = vadd.f32 %v918, %v1028
      %v1030 = vpop.f32.mrb[0].mxu0
      %1031 = vdwg.mxu0
      %1032 = vmatprep.subr.mxu0 0.0
      %v1033 = vand.u32 %v881, 4294901760
      %v1034 = vsub.f32 %v881, %v1033
      %v1035 = vand.u32 %v1034, 4294901760
      %v1036 = vsub.f32 %v1034, %v1035
      %v1037 = vand.u32 %v1036, 4294901760
      %1038 = vmatpush1.msra.mxu0 %v1037
      %1039 = vmatprep.subr.mxu0 0.0
      %v1040 = vand.u32 %v882, 4294901760
      %v1041 = vsub.f32 %v882, %v1040
      %v1042 = vand.u32 %v1041, 4294901760
      %v1043 = vsub.f32 %v1041, %v1042
      %v1044 = vand.u32 %v1043, 4294901760
      %1045 = vmatpush1.msra.mxu0 %v1044
      %1046 = vmatprep.subr.mxu0 0.0
      %v1047 = vand.u32 %v883, 4294901760
      %v1048 = vsub.f32 %v883, %v1047
      %v1049 = vand.u32 %v1048, 4294901760
      %v1050 = vsub.f32 %v1048, %v1049
      %v1051 = vand.u32 %v1050, 4294901760
      %1052 = vmatpush1.msra.mxu0 %v1051
      %1053 = vmatprep.subr.mxu0 0.0
      %v1054 = vand.u32 %v884, 4294901760
      %v1055 = vsub.f32 %v884, %v1054
      %v1056 = vand.u32 %v1055, 4294901760
      %v1057 = vsub.f32 %v1055, %v1056
      %v1058 = vand.u32 %v1057, 4294901760
      %1059 = vmatpush1.msra.mxu0 %v1058
      %1060 = vmatprep.subr.mxu0 0.0
      %v1061 = vand.u32 %v885, 4294901760
      %v1062 = vsub.f32 %v885, %v1061
      %v1063 = vand.u32 %v1062, 4294901760
      %v1064 = vsub.f32 %v1062, %v1063
      %v1065 = vand.u32 %v1064, 4294901760
      %1066 = vmatpush1.msra.mxu0 %v1065
      %1067 = vmatprep.subr.mxu0 0.0
      %v1068 = vand.u32 %v886, 4294901760
      %v1069 = vsub.f32 %v886, %v1068
      %v1070 = vand.u32 %v1069, 4294901760
      %v1071 = vsub.f32 %v1069, %v1070
      %v1072 = vand.u32 %v1071, 4294901760
      %1073 = vmatpush1.msra.mxu0 %v1072
      %1074 = vmatprep.subr.mxu0 0.0
      %v1075 = vand.u32 %v887, 4294901760
      %v1076 = vsub.f32 %v887, %v1075
      %v1077 = vand.u32 %v1076, 4294901760
      %v1078 = vsub.f32 %v1076, %v1077
      %v1079 = vand.u32 %v1078, 4294901760
      %1080 = vmatpush1.msra.mxu0 %v1079
      %1081 = vmatprep.subr.mxu0 0.0
      %v1082 = vand.u32 %v888, 4294901760
      %v1083 = vsub.f32 %v888, %v1082
      %v1084 = vand.u32 %v1083, 4294901760
      %v1085 = vsub.f32 %v1083, %v1084
      %v1086 = vand.u32 %v1085, 4294901760
      %1087 = vmatpush1.msra.mxu0 %v1086
      %1088 = vmatprep.subr.mxu0 0.0
      %v1089 = vand.u32 %v889, 4294901760
      %v1090 = vsub.f32 %v889, %v1089
      %v1091 = vand.u32 %v1090, 4294901760
      %v1092 = vsub.f32 %v1090, %v1091
      %v1093 = vand.u32 %v1092, 4294901760
      %1094 = vmatpush1.msra.mxu0 %v1093
      %1095 = vmatprep.subr.mxu0 0.0
      %v1096 = vand.u32 %v890, 4294901760
      %v1097 = vsub.f32 %v890, %v1096
      %v1098 = vand.u32 %v1097, 4294901760
      %v1099 = vsub.f32 %v1097, %v1098
      %v1100 = vand.u32 %v1099, 4294901760
      %1101 = vmatpush1.msra.mxu0 %v1100
      %1102 = vmatprep.subr.mxu0 0.0
      %v1103 = vand.u32 %v891, 4294901760
      %v1104 = vsub.f32 %v891, %v1103
      %v1105 = vand.u32 %v1104, 4294901760
      %v1106 = vsub.f32 %v1104, %v1105
      %v1107 = vand.u32 %v1106, 4294901760
      %1108 = vmatpush1.msra.mxu0 %v1107
      %1109 = vmatprep.subr.mxu0 0.0
      %v1110 = vand.u32 %v892, 4294901760
      %v1111 = vsub.f32 %v892, %v1110
      %v1112 = vand.u32 %v1111, 4294901760
      %v1113 = vsub.f32 %v1111, %v1112
      %v1114 = vand.u32 %v1113, 4294901760
      %1115 = vmatpush1.msra.mxu0 %v1114
      %1116 = vmatprep.subr.mxu0 0.0
      %v1117 = vand.u32 %v893, 4294901760
      %v1118 = vsub.f32 %v893, %v1117
      %v1119 = vand.u32 %v1118, 4294901760
      %v1120 = vsub.f32 %v1118, %v1119
      %v1121 = vand.u32 %v1120, 4294901760
      %1122 = vmatpush1.msra.mxu0 %v1121
      %1123 = vmatprep.subr.mxu0 0.0
      %v1124 = vand.u32 %v894, 4294901760
      %v1125 = vsub.f32 %v894, %v1124
      %v1126 = vand.u32 %v1125, 4294901760
      %v1127 = vsub.f32 %v1125, %v1126
      %v1128 = vand.u32 %v1127, 4294901760
      %1129 = vmatpush1.msra.mxu0 %v1128
      %1130 = vmatprep.subr.mxu0 0.0
      %v1131 = vand.u32 %v895, 4294901760
      %v1132 = vsub.f32 %v895, %v1131
      %v1133 = vand.u32 %v1132, 4294901760
      %v1134 = vsub.f32 %v1132, %v1133
      %v1135 = vand.u32 %v1134, 4294901760
      %1136 = vmatpush1.msra.mxu0 %v1135
      %1137 = vmatprep.subr.mxu0 0.0
      %v1138 = vand.u32 %v896, 4294901760
      %v1139 = vsub.f32 %v896, %v1138
      %v1140 = vand.u32 %v1139, 4294901760
      %v1141 = vsub.f32 %v1139, %v1140
      %v1142 = vand.u32 %v1141, 4294901760
      %1143 = vmatpush1.msra.mxu0 %v1142
      %1144 = vmatprep.subr.mxu0 0.0
      %v1145 = vand.u32 %v897, 4294901760
      %v1146 = vsub.f32 %v897, %v1145
      %v1147 = vand.u32 %v1146, 4294901760
      %v1148 = vsub.f32 %v1146, %v1147
      %v1149 = vand.u32 %v1148, 4294901760
      %1150 = vmatpush1.msra.mxu0 %v1149
      %1151 = vmatprep.subr.mxu0 0.0
      %v1152 = vand.u32 %v898, 4294901760
      %v1153 = vsub.f32 %v898, %v1152
      %v1154 = vand.u32 %v1153, 4294901760
      %v1155 = vsub.f32 %v1153, %v1154
      %v1156 = vand.u32 %v1155, 4294901760
      %1157 = vmatpush1.msra.mxu0 %v1156
      %1158 = vmatprep.subr.mxu0 0.0
      %v1159 = vand.u32 %v899, 4294901760
      %v1160 = vsub.f32 %v899, %v1159
      %v1161 = vand.u32 %v1160, 4294901760
      %v1162 = vsub.f32 %v1160, %v1161
      %v1163 = vand.u32 %v1162, 4294901760
      %1164 = vmatpush1.msra.mxu0 %v1163
      %1165 = vmatprep.subr.mxu0 0.0
      %v1166 = vand.u32 %v900, 4294901760
      %v1167 = vsub.f32 %v900, %v1166
      %v1168 = vand.u32 %v1167, 4294901760
      %v1169 = vsub.f32 %v1167, %v1168
      %v1170 = vand.u32 %v1169, 4294901760
      %1171 = vmatpush1.msra.mxu0 %v1170
      %1172 = vmatprep.subr.mxu0 0.0
      %v1173 = vand.u32 %v901, 4294901760
      %v1174 = vsub.f32 %v901, %v1173
      %v1175 = vand.u32 %v1174, 4294901760
      %v1176 = vsub.f32 %v1174, %v1175
      %v1177 = vand.u32 %v1176, 4294901760
      %1178 = vmatpush1.msra.mxu0 %v1177
      %1179 = vmatprep.subr.mxu0 0.0
      %v1180 = vand.u32 %v902, 4294901760
      %v1181 = vsub.f32 %v902, %v1180
      %v1182 = vand.u32 %v1181, 4294901760
      %v1183 = vsub.f32 %v1181, %v1182
      %v1184 = vand.u32 %v1183, 4294901760
      %1185 = vmatpush1.msra.mxu0 %v1184
      %1186 = vmatprep.subr.mxu0 0.0
      %v1187 = vand.u32 %v903, 4294901760
      %v1188 = vsub.f32 %v903, %v1187
      %v1189 = vand.u32 %v1188, 4294901760
      %v1190 = vsub.f32 %v1188, %v1189
      %v1191 = vand.u32 %v1190, 4294901760
      %1192 = vmatpush1.msra.mxu0 %v1191
      %1193 = vmatprep.subr.mxu0 0.0
      %v1194 = vand.u32 %v904, 4294901760
      %v1195 = vsub.f32 %v904, %v1194
      %v1196 = vand.u32 %v1195, 4294901760
      %v1197 = vsub.f32 %v1195, %v1196
      %v1198 = vand.u32 %v1197, 4294901760
      %1199 = vmatpush1.msra.mxu0 %v1198
      %1200 = vmatprep.subr.mxu0 0.0
      %v1201 = vand.u32 %v905, 4294901760
      %v1202 = vsub.f32 %v905, %v1201
      %v1203 = vand.u32 %v1202, 4294901760
      %v1204 = vsub.f32 %v1202, %v1203
      %v1205 = vand.u32 %v1204, 4294901760
      %1206 = vmatpush1.msra.mxu0 %v1205
      %1207 = vmatprep.subr.mxu0 0.0
      %v1208 = vand.u32 %v906, 4294901760
      %v1209 = vsub.f32 %v906, %v1208
      %v1210 = vand.u32 %v1209, 4294901760
      %v1211 = vsub.f32 %v1209, %v1210
      %v1212 = vand.u32 %v1211, 4294901760
      %1213 = vmatpush1.msra.mxu0 %v1212
      %1214 = vmatprep.subr.mxu0 0.0
      %v1215 = vand.u32 %v907, 4294901760
      %v1216 = vsub.f32 %v907, %v1215
      %v1217 = vand.u32 %v1216, 4294901760
      %v1218 = vsub.f32 %v1216, %v1217
      %v1219 = vand.u32 %v1218, 4294901760
      %1220 = vmatpush1.msra.mxu0 %v1219
      %1221 = vmatprep.subr.mxu0 0.0
      %v1222 = vand.u32 %v908, 4294901760
      %v1223 = vsub.f32 %v908, %v1222
      %v1224 = vand.u32 %v1223, 4294901760
      %v1225 = vsub.f32 %v1223, %v1224
      %v1226 = vand.u32 %v1225, 4294901760
      %1227 = vmatpush1.msra.mxu0 %v1226
      %1228 = vmatprep.subr.mxu0 0.0
      %v1229 = vand.u32 %v909, 4294901760
      %v1230 = vsub.f32 %v909, %v1229
      %v1231 = vand.u32 %v1230, 4294901760
      %v1232 = vsub.f32 %v1230, %v1231
      %v1233 = vand.u32 %v1232, 4294901760
      %1234 = vmatpush1.msra.mxu0 %v1233
      %1235 = vmatprep.subr.mxu0 0.0
      %v1236 = vand.u32 %v910, 4294901760
      %v1237 = vsub.f32 %v910, %v1236
      %v1238 = vand.u32 %v1237, 4294901760
      %v1239 = vsub.f32 %v1237, %v1238
      %v1240 = vand.u32 %v1239, 4294901760
      %1241 = vmatpush1.msra.mxu0 %v1240
      %1242 = vmatprep.subr.mxu0 0.0
      %v1243 = vand.u32 %v911, 4294901760
      %v1244 = vsub.f32 %v911, %v1243
      %v1245 = vand.u32 %v1244, 4294901760
      %v1246 = vsub.f32 %v1244, %v1245
      %v1247 = vand.u32 %v1246, 4294901760
      %1248 = vmatpush1.msra.mxu0 %v1247
      %1249 = vmatprep.subr.mxu0 0.0
      %v1250 = vand.u32 %v912, 4294901760
      %v1251 = vsub.f32 %v912, %v1250
      %v1252 = vand.u32 %v1251, 4294901760
      %v1253 = vsub.f32 %v1251, %v1252
      %v1254 = vand.u32 %v1253, 4294901760
      %1255 = vmatpush1.msra.mxu0 %v1254
      %v1256 = vand.u32 %v880, 4294901760
      %1257 = vmatprep.mubr.f32.mxu0 %v1256
      %v1258 = vand.u32 %v879, 4294901760
      %1259 = vmatmul.mubr.f32.gmra.mrb[0].mxu0 %v1258
      %v1260 = vpop.f32.mrb[0].mxu0
      %v1261 = vadd.f32 %v1029, %v1260
      %v1262 = vpop.f32.mrb[0].mxu0
      %1263 = vdwg.mxu0
      %1264 = vmatprep.subr.mxu0 0.0
      %v1265 = vand.u32 %v881, 4294901760
      %v1266 = vsub.f32 %v881, %v1265
      %1267 = vmatpush1.msra.mxu0 %v1266
      %1268 = vmatprep.subr.mxu0 0.0
      %v1269 = vand.u32 %v882, 4294901760
      %v1270 = vsub.f32 %v882, %v1269
      %1271 = vmatpush1.msra.mxu0 %v1270
      %1272 = vmatprep.subr.mxu0 0.0
      %v1273 = vand.u32 %v883, 4294901760
      %v1274 = vsub.f32 %v883, %v1273
      %1275 = vmatpush1.msra.mxu0 %v1274
      %1276 = vmatprep.subr.mxu0 0.0
      %v1277 = vand.u32 %v884, 4294901760
      %v1278 = vsub.f32 %v884, %v1277
      %1279 = vmatpush1.msra.mxu0 %v1278
      %1280 = vmatprep.subr.mxu0 0.0
      %v1281 = vand.u32 %v885, 4294901760
      %v1282 = vsub.f32 %v885, %v1281
      %1283 = vmatpush1.msra.mxu0 %v1282
      %1284 = vmatprep.subr.mxu0 0.0
      %v1285 = vand.u32 %v886, 4294901760
      %v1286 = vsub.f32 %v886, %v1285
      %1287 = vmatpush1.msra.mxu0 %v1286
      %1288 = vmatprep.subr.mxu0 0.0
      %v1289 = vand.u32 %v887, 4294901760
      %v1290 = vsub.f32 %v887, %v1289
      %1291 = vmatpush1.msra.mxu0 %v1290
      %1292 = vmatprep.subr.mxu0 0.0
      %v1293 = vand.u32 %v888, 4294901760
      %v1294 = vsub.f32 %v888, %v1293
      %1295 = vmatpush1.msra.mxu0 %v1294
      %1296 = vmatprep.subr.mxu0 0.0
      %v1297 = vand.u32 %v889, 4294901760
      %v1298 = vsub.f32 %v889, %v1297
      %1299 = vmatpush1.msra.mxu0 %v1298
      %1300 = vmatprep.subr.mxu0 0.0
      %v1301 = vand.u32 %v890, 4294901760
      %v1302 = vsub.f32 %v890, %v1301
      %1303 = vmatpush1.msra.mxu0 %v1302
      %1304 = vmatprep.subr.mxu0 0.0
      %v1305 = vand.u32 %v891, 4294901760
      %v1306 = vsub.f32 %v891, %v1305
      %1307 = vmatpush1.msra.mxu0 %v1306
      %1308 = vmatprep.subr.mxu0 0.0
      %v1309 = vand.u32 %v892, 4294901760
      %v1310 = vsub.f32 %v892, %v1309
      %1311 = vmatpush1.msra.mxu0 %v1310
      %1312 = vmatprep.subr.mxu0 0.0
      %v1313 = vand.u32 %v893, 4294901760
      %v1314 = vsub.f32 %v893, %v1313
      %1315 = vmatpush1.msra.mxu0 %v1314
      %1316 = vmatprep.subr.mxu0 0.0
      %v1317 = vand.u32 %v894, 4294901760
      %v1318 = vsub.f32 %v894, %v1317
      %1319 = vmatpush1.msra.mxu0 %v1318
      %1320 = vmatprep.subr.mxu0 0.0
      %v1321 = vand.u32 %v895, 4294901760
      %v1322 = vsub.f32 %v895, %v1321
      %1323 = vmatpush1.msra.mxu0 %v1322
      %1324 = vmatprep.subr.mxu0 0.0
      %v1325 = vand.u32 %v896, 4294901760
      %v1326 = vsub.f32 %v896, %v1325
      %1327 = vmatpush1.msra.mxu0 %v1326
      %1328 = vmatprep.subr.mxu0 0.0
      %v1329 = vand.u32 %v897, 4294901760
      %v1330 = vsub.f32 %v897, %v1329
      %1331 = vmatpush1.msra.mxu0 %v1330
      %1332 = vmatprep.subr.mxu0 0.0
      %v1333 = vand.u32 %v898, 4294901760
      %v1334 = vsub.f32 %v898, %v1333
      %1335 = vmatpush1.msra.mxu0 %v1334
      %1336 = vmatprep.subr.mxu0 0.0
      %v1337 = vand.u32 %v899, 4294901760
      %v1338 = vsub.f32 %v899, %v1337
      %1339 = vmatpush1.msra.mxu0 %v1338
      %1340 = vmatprep.subr.mxu0 0.0
      %v1341 = vand.u32 %v900, 4294901760
      %v1342 = vsub.f32 %v900, %v1341
      %1343 = vmatpush1.msra.mxu0 %v1342
      %1344 = vmatprep.subr.mxu0 0.0
      %v1345 = vand.u32 %v901, 4294901760
      %v1346 = vsub.f32 %v901, %v1345
      %1347 = vmatpush1.msra.mxu0 %v1346
      %1348 = vmatprep.subr.mxu0 0.0
      %v1349 = vand.u32 %v902, 4294901760
      %v1350 = vsub.f32 %v902, %v1349
      %1351 = vmatpush1.msra.mxu0 %v1350
      %1352 = vmatprep.subr.mxu0 0.0
      %v1353 = vand.u32 %v903, 4294901760
      %v1354 = vsub.f32 %v903, %v1353
      %1355 = vmatpush1.msra.mxu0 %v1354
      %1356 = vmatprep.subr.mxu0 0.0
      %v1357 = vand.u32 %v904, 4294901760
      %v1358 = vsub.f32 %v904, %v1357
      %1359 = vmatpush1.msra.mxu0 %v1358
      %1360 = vmatprep.subr.mxu0 0.0
      %v1361 = vand.u32 %v905, 4294901760
      %v1362 = vsub.f32 %v905, %v1361
      %1363 = vmatpush1.msra.mxu0 %v1362
      %1364 = vmatprep.subr.mxu0 0.0
      %v1365 = vand.u32 %v906, 4294901760
      %v1366 = vsub.f32 %v906, %v1365
      %1367 = vmatpush1.msra.mxu0 %v1366
      %1368 = vmatprep.subr.mxu0 0.0
      %v1369 = vand.u32 %v907, 4294901760
      %v1370 = vsub.f32 %v907, %v1369
      %1371 = vmatpush1.msra.mxu0 %v1370
      %1372 = vmatprep.subr.mxu0 0.0
      %v1373 = vand.u32 %v908, 4294901760
      %v1374 = vsub.f32 %v908, %v1373
      %1375 = vmatpush1.msra.mxu0 %v1374
      %1376 = vmatprep.subr.mxu0 0.0
      %v1377 = vand.u32 %v909, 4294901760
      %v1378 = vsub.f32 %v909, %v1377
      %1379 = vmatpush1.msra.mxu0 %v1378
      %1380 = vmatprep.subr.mxu0 0.0
      %v1381 = vand.u32 %v910, 4294901760
      %v1382 = vsub.f32 %v910, %v1381
      %1383 = vmatpush1.msra.mxu0 %v1382
      %1384 = vmatprep.subr.mxu0 0.0
      %v1385 = vand.u32 %v911, 4294901760
      %v1386 = vsub.f32 %v911, %v1385
      %1387 = vmatpush1.msra.mxu0 %v1386
      %1388 = vmatprep.subr.mxu0 0.0
      %v1389 = vand.u32 %v912, 4294901760
      %v1390 = vsub.f32 %v912, %v1389
      %1391 = vmatpush1.msra.mxu0 %v1390
      %v1392 = vand.u32 %v880, 4294901760
      %v1393 = vsub.f32 %v880, %v1392
      %1394 = vmatprep.mubr.f32.mxu0 %v1393
      %v1395 = vand.u32 %v879, 4294901760
      %v1396 = vsub.f32 %v879, %v1395
      %1397 = vmatmul.mubr.f32.gmra.mrb[0].mxu0 %v1396
      %v1398 = vpop.f32.mrb[0].mxu0
      %v1399 = vadd.f32 %v1261, %v1398
      %v1400 = vpop.f32.mrb[0].mxu0
      %1401 = vdwg.mxu0
      %1402 = vmatprep.subr.mxu0 0.0
      %v1403 = vand.u32 %v881, 4294901760
      %1404 = vmatpush1.msra.mxu0 %v1403
      %1405 = vmatprep.subr.mxu0 0.0
      %v1406 = vand.u32 %v882, 4294901760
      %1407 = vmatpush1.msra.mxu0 %v1406
      %1408 = vmatprep.subr.mxu0 0.0
      %v1409 = vand.u32 %v883, 4294901760
      %1410 = vmatpush1.msra.mxu0 %v1409
      %1411 = vmatprep.subr.mxu0 0.0
      %v1412 = vand.u32 %v884, 4294901760
      %1413 = vmatpush1.msra.mxu0 %v1412
      %1414 = vmatprep.subr.mxu0 0.0
      %v1415 = vand.u32 %v885, 4294901760
      %1416 = vmatpush1.msra.mxu0 %v1415
      %1417 = vmatprep.subr.mxu0 0.0
      %v1418 = vand.u32 %v886, 4294901760
      %1419 = vmatpush1.msra.mxu0 %v1418
      %1420 = vmatprep.subr.mxu0 0.0
      %v1421 = vand.u32 %v887, 4294901760
      %1422 = vmatpush1.msra.mxu0 %v1421
      %1423 = vmatprep.subr.mxu0 0.0
      %v1424 = vand.u32 %v888, 4294901760
      %1425 = vmatpush1.msra.mxu0 %v1424
      %1426 = vmatprep.subr.mxu0 0.0
      %v1427 = vand.u32 %v889, 4294901760
      %1428 = vmatpush1.msra.mxu0 %v1427
      %1429 = vmatprep.subr.mxu0 0.0
      %v1430 = vand.u32 %v890, 4294901760
      %1431 = vmatpush1.msra.mxu0 %v1430
      %1432 = vmatprep.subr.mxu0 0.0
      %v1433 = vand.u32 %v891, 4294901760
      %1434 = vmatpush1.msra.mxu0 %v1433
      %1435 = vmatprep.subr.mxu0 0.0
      %v1436 = vand.u32 %v892, 4294901760
      %1437 = vmatpush1.msra.mxu0 %v1436
      %1438 = vmatprep.subr.mxu0 0.0
      %v1439 = vand.u32 %v893, 4294901760
      %1440 = vmatpush1.msra.mxu0 %v1439
      %1441 = vmatprep.subr.mxu0 0.0
      %v1442 = vand.u32 %v894, 4294901760
      %1443 = vmatpush1.msra.mxu0 %v1442
      %1444 = vmatprep.subr.mxu0 0.0
      %v1445 = vand.u32 %v895, 4294901760
      %1446 = vmatpush1.msra.mxu0 %v1445
      %1447 = vmatprep.subr.mxu0 0.0
      %v1448 = vand.u32 %v896, 4294901760
      %1449 = vmatpush1.msra.mxu0 %v1448
      %1450 = vmatprep.subr.mxu0 0.0
      %v1451 = vand.u32 %v897, 4294901760
      %1452 = vmatpush1.msra.mxu0 %v1451
      %1453 = vmatprep.subr.mxu0 0.0
      %v1454 = vand.u32 %v898, 4294901760
      %1455 = vmatpush1.msra.mxu0 %v1454
      %1456 = vmatprep.subr.mxu0 0.0
      %v1457 = vand.u32 %v899, 4294901760
      %1458 = vmatpush1.msra.mxu0 %v1457
      %1459 = vmatprep.subr.mxu0 0.0
      %v1460 = vand.u32 %v900, 4294901760
      %1461 = vmatpush1.msra.mxu0 %v1460
      %1462 = vmatprep.subr.mxu0 0.0
      %v1463 = vand.u32 %v901, 4294901760
      %1464 = vmatpush1.msra.mxu0 %v1463
      %1465 = vmatprep.subr.mxu0 0.0
      %v1466 = vand.u32 %v902, 4294901760
      %1467 = vmatpush1.msra.mxu0 %v1466
      %1468 = vmatprep.subr.mxu0 0.0
      %v1469 = vand.u32 %v903, 4294901760
      %1470 = vmatpush1.msra.mxu0 %v1469
      %1471 = vmatprep.subr.mxu0 0.0
      %v1472 = vand.u32 %v904, 4294901760
      %1473 = vmatpush1.msra.mxu0 %v1472
      %1474 = vmatprep.subr.mxu0 0.0
      %v1475 = vand.u32 %v905, 4294901760
      %1476 = vmatpush1.msra.mxu0 %v1475
      %1477 = vmatprep.subr.mxu0 0.0
      %v1478 = vand.u32 %v906, 4294901760
      %1479 = vmatpush1.msra.mxu0 %v1478
      %1480 = vmatprep.subr.mxu0 0.0
      %v1481 = vand.u32 %v907, 4294901760
      %1482 = vmatpush1.msra.mxu0 %v1481
      %1483 = vmatprep.subr.mxu0 0.0
      %v1484 = vand.u32 %v908, 4294901760
      %1485 = vmatpush1.msra.mxu0 %v1484
      %1486 = vmatprep.subr.mxu0 0.0
      %v1487 = vand.u32 %v909, 4294901760
      %1488 = vmatpush1.msra.mxu0 %v1487
      %1489 = vmatprep.subr.mxu0 0.0
      %v1490 = vand.u32 %v910, 4294901760
      %1491 = vmatpush1.msra.mxu0 %v1490
      %1492 = vmatprep.subr.mxu0 0.0
      %v1493 = vand.u32 %v911, 4294901760
      %1494 = vmatpush1.msra.mxu0 %v1493
      %1495 = vmatprep.subr.mxu0 0.0
      %v1496 = vand.u32 %v912, 4294901760
      %1497 = vmatpush1.msra.mxu0 %v1496
      %v1498 = vand.u32 %v880, 4294901760
      %v1499 = vsub.f32 %v880, %v1498
      %v1500 = vand.u32 %v1499, 4294901760
      %1501 = vmatprep.mubr.f32.mxu0 %v1500
      %v1502 = vand.u32 %v879, 4294901760
      %v1503 = vsub.f32 %v879, %v1502
      %v1504 = vand.u32 %v1503, 4294901760
      %1505 = vmatmul.mubr.f32.gmra.mrb[0].mxu0 %v1504
      %v1506 = vpop.f32.mrb[0].mxu0
      %v1507 = vadd.f32 %v1399, %v1506
      %v1508 = vpop.f32.mrb[0].mxu0
      %1509 = vdwg.mxu0
      %1510 = vmatprep.subr.mxu0 0.0
      %v1511 = vand.u32 %v881, 4294901760
      %v1512 = vsub.f32 %v881, %v1511
      %v1513 = vand.u32 %v1512, 4294901760
      %1514 = vmatpush1.msra.mxu0 %v1513
      %1515 = vmatprep.subr.mxu0 0.0
      %v1516 = vand.u32 %v882, 4294901760
      %v1517 = vsub.f32 %v882, %v1516
      %v1518 = vand.u32 %v1517, 4294901760
      %1519 = vmatpush1.msra.mxu0 %v1518
      %1520 = vmatprep.subr.mxu0 0.0
      %v1521 = vand.u32 %v883, 4294901760
      %v1522 = vsub.f32 %v883, %v1521
      %v1523 = vand.u32 %v1522, 4294901760
      %1524 = vmatpush1.msra.mxu0 %v1523
      %1525 = vmatprep.subr.mxu0 0.0
      %v1526 = vand.u32 %v884, 4294901760
      %v1527 = vsub.f32 %v884, %v1526
      %v1528 = vand.u32 %v1527, 4294901760
      %1529 = vmatpush1.msra.mxu0 %v1528
      %1530 = vmatprep.subr.mxu0 0.0
      %v1531 = vand.u32 %v885, 4294901760
      %v1532 = vsub.f32 %v885, %v1531
      %v1533 = vand.u32 %v1532, 4294901760
      %1534 = vmatpush1.msra.mxu0 %v1533
      %1535 = vmatprep.subr.mxu0 0.0
      %v1536 = vand.u32 %v886, 4294901760
      %v1537 = vsub.f32 %v886, %v1536
      %v1538 = vand.u32 %v1537, 4294901760
      %1539 = vmatpush1.msra.mxu0 %v1538
      %1540 = vmatprep.subr.mxu0 0.0
      %v1541 = vand.u32 %v887, 4294901760
      %v1542 = vsub.f32 %v887, %v1541
      %v1543 = vand.u32 %v1542, 4294901760
      %1544 = vmatpush1.msra.mxu0 %v1543
      %1545 = vmatprep.subr.mxu0 0.0
      %v1546 = vand.u32 %v888, 4294901760
      %v1547 = vsub.f32 %v888, %v1546
      %v1548 = vand.u32 %v1547, 4294901760
      %1549 = vmatpush1.msra.mxu0 %v1548
      %1550 = vmatprep.subr.mxu0 0.0
      %v1551 = vand.u32 %v889, 4294901760
      %v1552 = vsub.f32 %v889, %v1551
      %v1553 = vand.u32 %v1552, 4294901760
      %1554 = vmatpush1.msra.mxu0 %v1553
      %1555 = vmatprep.subr.mxu0 0.0
      %v1556 = vand.u32 %v890, 4294901760
      %v1557 = vsub.f32 %v890, %v1556
      %v1558 = vand.u32 %v1557, 4294901760
      %1559 = vmatpush1.msra.mxu0 %v1558
      %1560 = vmatprep.subr.mxu0 0.0
      %v1561 = vand.u32 %v891, 4294901760
      %v1562 = vsub.f32 %v891, %v1561
      %v1563 = vand.u32 %v1562, 4294901760
      %1564 = vmatpush1.msra.mxu0 %v1563
      %1565 = vmatprep.subr.mxu0 0.0
      %v1566 = vand.u32 %v892, 4294901760
      %v1567 = vsub.f32 %v892, %v1566
      %v1568 = vand.u32 %v1567, 4294901760
      %1569 = vmatpush1.msra.mxu0 %v1568
      %1570 = vmatprep.subr.mxu0 0.0
      %v1571 = vand.u32 %v893, 4294901760
      %v1572 = vsub.f32 %v893, %v1571
      %v1573 = vand.u32 %v1572, 4294901760
      %1574 = vmatpush1.msra.mxu0 %v1573
      %1575 = vmatprep.subr.mxu0 0.0
      %v1576 = vand.u32 %v894, 4294901760
      %v1577 = vsub.f32 %v894, %v1576
      %v1578 = vand.u32 %v1577, 4294901760
      %1579 = vmatpush1.msra.mxu0 %v1578
      %1580 = vmatprep.subr.mxu0 0.0
      %v1581 = vand.u32 %v895, 4294901760
      %v1582 = vsub.f32 %v895, %v1581
      %v1583 = vand.u32 %v1582, 4294901760
      %1584 = vmatpush1.msra.mxu0 %v1583
      %1585 = vmatprep.subr.mxu0 0.0
      %v1586 = vand.u32 %v896, 4294901760
      %v1587 = vsub.f32 %v896, %v1586
      %v1588 = vand.u32 %v1587, 4294901760
      %1589 = vmatpush1.msra.mxu0 %v1588
      %1590 = vmatprep.subr.mxu0 0.0
      %v1591 = vand.u32 %v897, 4294901760
      %v1592 = vsub.f32 %v897, %v1591
      %v1593 = vand.u32 %v1592, 4294901760
      %1594 = vmatpush1.msra.mxu0 %v1593
      %1595 = vmatprep.subr.mxu0 0.0
      %v1596 = vand.u32 %v898, 4294901760
      %v1597 = vsub.f32 %v898, %v1596
      %v1598 = vand.u32 %v1597, 4294901760
      %1599 = vmatpush1.msra.mxu0 %v1598
      %1600 = vmatprep.subr.mxu0 0.0
      %v1601 = vand.u32 %v899, 4294901760
      %v1602 = vsub.f32 %v899, %v1601
      %v1603 = vand.u32 %v1602, 4294901760
      %1604 = vmatpush1.msra.mxu0 %v1603
      %1605 = vmatprep.subr.mxu0 0.0
      %v1606 = vand.u32 %v900, 4294901760
      %v1607 = vsub.f32 %v900, %v1606
      %v1608 = vand.u32 %v1607, 4294901760
      %1609 = vmatpush1.msra.mxu0 %v1608
      %1610 = vmatprep.subr.mxu0 0.0
      %v1611 = vand.u32 %v901, 4294901760
      %v1612 = vsub.f32 %v901, %v1611
      %v1613 = vand.u32 %v1612, 4294901760
      %1614 = vmatpush1.msra.mxu0 %v1613
      %1615 = vmatprep.subr.mxu0 0.0
      %v1616 = vand.u32 %v902, 4294901760
      %v1617 = vsub.f32 %v902, %v1616
      %v1618 = vand.u32 %v1617, 4294901760
      %1619 = vmatpush1.msra.mxu0 %v1618
      %1620 = vmatprep.subr.mxu0 0.0
      %v1621 = vand.u32 %v903, 4294901760
      %v1622 = vsub.f32 %v903, %v1621
      %v1623 = vand.u32 %v1622, 4294901760
      %1624 = vmatpush1.msra.mxu0 %v1623
      %1625 = vmatprep.subr.mxu0 0.0
      %v1626 = vand.u32 %v904, 4294901760
      %v1627 = vsub.f32 %v904, %v1626
      %v1628 = vand.u32 %v1627, 4294901760
      %1629 = vmatpush1.msra.mxu0 %v1628
      %1630 = vmatprep.subr.mxu0 0.0
      %v1631 = vand.u32 %v905, 4294901760
      %v1632 = vsub.f32 %v905, %v1631
      %v1633 = vand.u32 %v1632, 4294901760
      %1634 = vmatpush1.msra.mxu0 %v1633
      %1635 = vmatprep.subr.mxu0 0.0
      %v1636 = vand.u32 %v906, 4294901760
      %v1637 = vsub.f32 %v906, %v1636
      %v1638 = vand.u32 %v1637, 4294901760
      %1639 = vmatpush1.msra.mxu0 %v1638
      %1640 = vmatprep.subr.mxu0 0.0
      %v1641 = vand.u32 %v907, 4294901760
      %v1642 = vsub.f32 %v907, %v1641
      %v1643 = vand.u32 %v1642, 4294901760
      %1644 = vmatpush1.msra.mxu0 %v1643
      %1645 = vmatprep.subr.mxu0 0.0
      %v1646 = vand.u32 %v908, 4294901760
      %v1647 = vsub.f32 %v908, %v1646
      %v1648 = vand.u32 %v1647, 4294901760
      %1649 = vmatpush1.msra.mxu0 %v1648
      %1650 = vmatprep.subr.mxu0 0.0
      %v1651 = vand.u32 %v909, 4294901760
      %v1652 = vsub.f32 %v909, %v1651
      %v1653 = vand.u32 %v1652, 4294901760
      %1654 = vmatpush1.msra.mxu0 %v1653
      %1655 = vmatprep.subr.mxu0 0.0
      %v1656 = vand.u32 %v910, 4294901760
      %v1657 = vsub.f32 %v910, %v1656
      %v1658 = vand.u32 %v1657, 4294901760
      %1659 = vmatpush1.msra.mxu0 %v1658
      %1660 = vmatprep.subr.mxu0 0.0
      %v1661 = vand.u32 %v911, 4294901760
      %v1662 = vsub.f32 %v911, %v1661
      %v1663 = vand.u32 %v1662, 4294901760
      %1664 = vmatpush1.msra.mxu0 %v1663
      %1665 = vmatprep.subr.mxu0 0.0
      %v1666 = vand.u32 %v912, 4294901760
      %v1667 = vsub.f32 %v912, %v1666
      %v1668 = vand.u32 %v1667, 4294901760
      %1669 = vmatpush1.msra.mxu0 %v1668
      %v1670 = vand.u32 %v880, 4294901760
      %1671 = vmatprep.mubr.f32.mxu0 %v1670
      %v1672 = vand.u32 %v879, 4294901760
      %1673 = vmatmul.mubr.f32.gmra.mrb[0].mxu0 %v1672
      %v1674 = vpop.f32.mrb[0].mxu0
      %v1675 = vadd.f32 %v1507, %v1674
      %v1676 = vpop.f32.mrb[0].mxu0
      %1677 = vdwg.mxu0
      %1678 = vmatprep.subr.mxu0 0.0
      %v1679 = vand.u32 %v881, 4294901760
      %1680 = vmatpush1.msra.mxu0 %v1679
      %1681 = vmatprep.subr.mxu0 0.0
      %v1682 = vand.u32 %v882, 4294901760
      %1683 = vmatpush1.msra.mxu0 %v1682
      %1684 = vmatprep.subr.mxu0 0.0
      %v1685 = vand.u32 %v883, 4294901760
      %1686 = vmatpush1.msra.mxu0 %v1685
      %1687 = vmatprep.subr.mxu0 0.0
      %v1688 = vand.u32 %v884, 4294901760
      %1689 = vmatpush1.msra.mxu0 %v1688
      %1690 = vmatprep.subr.mxu0 0.0
      %v1691 = vand.u32 %v885, 4294901760
      %1692 = vmatpush1.msra.mxu0 %v1691
      %1693 = vmatprep.subr.mxu0 0.0
      %v1694 = vand.u32 %v886, 4294901760
      %1695 = vmatpush1.msra.mxu0 %v1694
      %1696 = vmatprep.subr.mxu0 0.0
      %v1697 = vand.u32 %v887, 4294901760
      %1698 = vmatpush1.msra.mxu0 %v1697
      %1699 = vmatprep.subr.mxu0 0.0
      %v1700 = vand.u32 %v888, 4294901760
      %1701 = vmatpush1.msra.mxu0 %v1700
      %1702 = vmatprep.subr.mxu0 0.0
      %v1703 = vand.u32 %v889, 4294901760
      %1704 = vmatpush1.msra.mxu0 %v1703
      %1705 = vmatprep.subr.mxu0 0.0
      %v1706 = vand.u32 %v890, 4294901760
      %1707 = vmatpush1.msra.mxu0 %v1706
      %1708 = vmatprep.subr.mxu0 0.0
      %v1709 = vand.u32 %v891, 4294901760
      %1710 = vmatpush1.msra.mxu0 %v1709
      %1711 = vmatprep.subr.mxu0 0.0
      %v1712 = vand.u32 %v892, 4294901760
      %1713 = vmatpush1.msra.mxu0 %v1712
      %1714 = vmatprep.subr.mxu0 0.0
      %v1715 = vand.u32 %v893, 4294901760
      %1716 = vmatpush1.msra.mxu0 %v1715
      %1717 = vmatprep.subr.mxu0 0.0
      %v1718 = vand.u32 %v894, 4294901760
      %1719 = vmatpush1.msra.mxu0 %v1718
      %1720 = vmatprep.subr.mxu0 0.0
      %v1721 = vand.u32 %v895, 4294901760
      %1722 = vmatpush1.msra.mxu0 %v1721
      %1723 = vmatprep.subr.mxu0 0.0
      %v1724 = vand.u32 %v896, 4294901760
      %1725 = vmatpush1.msra.mxu0 %v1724
      %1726 = vmatprep.subr.mxu0 0.0
      %v1727 = vand.u32 %v897, 4294901760
      %1728 = vmatpush1.msra.mxu0 %v1727
      %1729 = vmatprep.subr.mxu0 0.0
      %v1730 = vand.u32 %v898, 4294901760
      %1731 = vmatpush1.msra.mxu0 %v1730
      %1732 = vmatprep.subr.mxu0 0.0
      %v1733 = vand.u32 %v899, 4294901760
      %1734 = vmatpush1.msra.mxu0 %v1733
      %1735 = vmatprep.subr.mxu0 0.0
      %v1736 = vand.u32 %v900, 4294901760
      %1737 = vmatpush1.msra.mxu0 %v1736
      %1738 = vmatprep.subr.mxu0 0.0
      %v1739 = vand.u32 %v901, 4294901760
      %1740 = vmatpush1.msra.mxu0 %v1739
      %1741 = vmatprep.subr.mxu0 0.0
      %v1742 = vand.u32 %v902, 4294901760
      %1743 = vmatpush1.msra.mxu0 %v1742
      %1744 = vmatprep.subr.mxu0 0.0
      %v1745 = vand.u32 %v903, 4294901760
      %1746 = vmatpush1.msra.mxu0 %v1745
      %1747 = vmatprep.subr.mxu0 0.0
      %v1748 = vand.u32 %v904, 4294901760
      %1749 = vmatpush1.msra.mxu0 %v1748
      %1750 = vmatprep.subr.mxu0 0.0
      %v1751 = vand.u32 %v905, 4294901760
      %1752 = vmatpush1.msra.mxu0 %v1751
      %1753 = vmatprep.subr.mxu0 0.0
      %v1754 = vand.u32 %v906, 4294901760
      %1755 = vmatpush1.msra.mxu0 %v1754
      %1756 = vmatprep.subr.mxu0 0.0
      %v1757 = vand.u32 %v907, 4294901760
      %1758 = vmatpush1.msra.mxu0 %v1757
      %1759 = vmatprep.subr.mxu0 0.0
      %v1760 = vand.u32 %v908, 4294901760
      %1761 = vmatpush1.msra.mxu0 %v1760
      %1762 = vmatprep.subr.mxu0 0.0
      %v1763 = vand.u32 %v909, 4294901760
      %1764 = vmatpush1.msra.mxu0 %v1763
      %1765 = vmatprep.subr.mxu0 0.0
      %v1766 = vand.u32 %v910, 4294901760
      %1767 = vmatpush1.msra.mxu0 %v1766
      %1768 = vmatprep.subr.mxu0 0.0
      %v1769 = vand.u32 %v911, 4294901760
      %1770 = vmatpush1.msra.mxu0 %v1769
      %1771 = vmatprep.subr.mxu0 0.0
      %v1772 = vand.u32 %v912, 4294901760
      %1773 = vmatpush1.msra.mxu0 %v1772
      %v1774 = vand.u32 %v880, 4294901760
      %1775 = vmatprep.mubr.f32.mxu0 %v1774
      %v1776 = vand.u32 %v879, 4294901760
      %1777 = vmatmul.mubr.f32.gmra.mrb[0].mxu0 %v1776
      %v1778 = vpop.f32.mrb[0].mxu0
      %v1779 = vadd.f32 %v1675, %v1778
      %v1780 = vpop.f32.mrb[0].mxu0
      %1781 = vdwg.mxu0
      %vm1782 = vcmp.ge.f32.partialorder %v1779, 0.0
      %v1783 = vmul.f32 %v1779, 0.01
      %v1784 = vsel %vm1782, %v1779, %v1783
      %v1785 = vld [vmem:[%s5] sm:$0xff]
      %v1786 = vld [vmem:[%s5 + $0x8] sm:$0xff]
      %v1787 = vld [vmem:[%s5 + $0x10] sm:$0xff]
      %v1788 = vld [vmem:[%s5 + $0x18] sm:$0xff]
      %v1789 = vld [vmem:[%s5 + $0x20] sm:$0xff]
      %v1790 = vld [vmem:[%s5 + $0x28] sm:$0xff]
      %v1791 = vld [vmem:[%s5 + $0x30] sm:$0xff]
      %v1792 = vld [vmem:[%s5 + $0x38] sm:$0xff]
      %v1793 = vld [vmem:[%s6] sm:$0x1]
      %v1795 = vlaneseq
      %v1796 = vshrl.u32 %v1795, 7
      %v1797 = vsub.s32 0, %v1796
      %v1798 = vrot.slane %v1793, %v1797
      %vm1800 = vcmask 523264
      %v1802 = vsel %vm1800, %v1784, 0
      %1804 = vmatprep.subr.mxu0 0.0
      %v1805 = vand.u32 %v1785, 4294901760
      %1806 = vmatpush1.msra.mxu0 %v1805
      %1807 = vmatprep.subr.mxu0 0.0
      %v1808 = vand.u32 %v1786, 4294901760
      %1809 = vmatpush1.msra.mxu0 %v1808
      %1810 = vmatprep.subr.mxu0 0.0
      %v1811 = vand.u32 %v1787, 4294901760
      %1812 = vmatpush1.msra.mxu0 %v1811
      %1813 = vmatprep.subr.mxu0 0.0
      %v1814 = vand.u32 %v1788, 4294901760
      %1815 = vmatpush1.msra.mxu0 %v1814
      %1816 = vmatprep.subr.mxu0 0.0
      %v1817 = vand.u32 %v1789, 4294901760
      %1818 = vmatpush1.msra.mxu0 %v1817
      %1819 = vmatprep.subr.mxu0 0.0
      %v1820 = vand.u32 %v1790, 4294901760
      %1821 = vmatpush1.msra.mxu0 %v1820
      %1822 = vmatprep.subr.mxu0 0.0
      %v1823 = vand.u32 %v1791, 4294901760
      %1824 = vmatpush1.msra.mxu0 %v1823
      %1825 = vmatprep.subr.mxu0 0.0
      %v1826 = vand.u32 %v1792, 4294901760
      %1827 = vmatpush1.msra.mxu0 %v1826
      %1828 = vmatprep.subr.mxu0 0.0
      %1829 = vmatpush1.msra.mxu0 0.0
      %1830 = vmatprep.subr.mxu0 0.0
      %1831 = vmatpush1.msra.mxu0 0.0
      %1832 = vmatprep.subr.mxu0 0.0
      %1833 = vmatpush1.msra.mxu0 0.0
      %1834 = vmatprep.subr.mxu0 0.0
      %1835 = vmatpush1.msra.mxu0 0.0
      %1836 = vmatprep.subr.mxu0 0.0
      %1837 = vmatpush1.msra.mxu0 0.0
      %1838 = vmatprep.subr.mxu0 0.0
      %1839 = vmatpush1.msra.mxu0 0.0
      %1840 = vmatprep.subr.mxu0 0.0
      %1841 = vmatpush1.msra.mxu0 0.0
      %1842 = vmatprep.subr.mxu0 0.0
      %1843 = vmatpush1.msra.mxu0 0.0
      %1844 = vmatprep.subr.mxu0 0.0
      %1845 = vmatpush1.msra.mxu0 0.0
      %1846 = vmatprep.subr.mxu0 0.0
      %1847 = vmatpush1.msra.mxu0 0.0
      %1848 = vmatprep.subr.mxu0 0.0
      %1849 = vmatpush1.msra.mxu0 0.0
      %1850 = vmatprep.subr.mxu0 0.0
      %1851 = vmatpush1.msra.mxu0 0.0
      %1852 = vmatprep.subr.mxu0 0.0
      %1853 = vmatpush1.msra.mxu0 0.0
      %1854 = vmatprep.subr.mxu0 0.0
      %1855 = vmatpush1.msra.mxu0 0.0
      %1856 = vmatprep.subr.mxu0 0.0
      %1857 = vmatpush1.msra.mxu0 0.0
      %1858 = vmatprep.subr.mxu0 0.0
      %1859 = vmatpush1.msra.mxu0 0.0
      %1860 = vmatprep.subr.mxu0 0.0
      %1861 = vmatpush1.msra.mxu0 0.0
      %1862 = vmatprep.subr.mxu0 0.0
      %1863 = vmatpush1.msra.mxu0 0.0
      %1864 = vmatprep.subr.mxu0 0.0
      %1865 = vmatpush1.msra.mxu0 0.0
      %1866 = vmatprep.subr.mxu0 0.0
      %1867 = vmatpush1.msra.mxu0 0.0
      %1868 = vmatprep.subr.mxu0 0.0
      %1869 = vmatpush1.msra.mxu0 0.0
      %1870 = vmatprep.subr.mxu0 0.0
      %1871 = vmatpush1.msra.mxu0 0.0
      %1872 = vmatprep.subr.mxu0 0.0
      %1873 = vmatpush1.msra.mxu0 0.0
      %1874 = vmatprep.subr.mxu0 0.0
      %1875 = vmatpush1.msra.mxu0 0.0
      %1876 = vmatprep.mubr.f32.mxu0 0.0
      %v1877 = vand.u32 %v1802, 4294901760
      %v1878 = vsub.f32 %v1802, %v1877
      %v1879 = vand.u32 %v1878, 4294901760
      %v1880 = vsub.f32 %v1878, %v1879
      %v1881 = vand.u32 %v1880, 4294901760
      %1882 = vmatmul.mubr.f32.gmra.mrb[0].mxu0 %v1881
      %v1883 = vpop.f32.mrb[0].mxu0
      %v1884 = vadd.f32 %v1798, %v1883
      %v1885 = vpop.f32.mrb[0].mxu0
      %1886 = vdwg.mxu0
      %1887 = vmatprep.subr.mxu0 0.0
      %v1888 = vand.u32 %v1785, 4294901760
      %v1889 = vsub.f32 %v1785, %v1888
      %v1890 = vand.u32 %v1889, 4294901760
      %v1891 = vsub.f32 %v1889, %v1890
      %v1892 = vand.u32 %v1891, 4294901760
      %1893 = vmatpush1.msra.mxu0 %v1892
      %1894 = vmatprep.subr.mxu0 0.0
      %v1895 = vand.u32 %v1786, 4294901760
      %v1896 = vsub.f32 %v1786, %v1895
      %v1897 = vand.u32 %v1896, 4294901760
      %v1898 = vsub.f32 %v1896, %v1897
      %v1899 = vand.u32 %v1898, 4294901760
      %1900 = vmatpush1.msra.mxu0 %v1899
      %1901 = vmatprep.subr.mxu0 0.0
      %v1902 = vand.u32 %v1787, 4294901760
      %v1903 = vsub.f32 %v1787, %v1902
      %v1904 = vand.u32 %v1903, 4294901760
      %v1905 = vsub.f32 %v1903, %v1904
      %v1906 = vand.u32 %v1905, 4294901760
      %1907 = vmatpush1.msra.mxu0 %v1906
      %1908 = vmatprep.subr.mxu0 0.0
      %v1909 = vand.u32 %v1788, 4294901760
      %v1910 = vsub.f32 %v1788, %v1909
      %v1911 = vand.u32 %v1910, 4294901760
      %v1912 = vsub.f32 %v1910, %v1911
      %v1913 = vand.u32 %v1912, 4294901760
      %1914 = vmatpush1.msra.mxu0 %v1913
      %1915 = vmatprep.subr.mxu0 0.0
      %v1916 = vand.u32 %v1789, 4294901760
      %v1917 = vsub.f32 %v1789, %v1916
      %v1918 = vand.u32 %v1917, 4294901760
      %v1919 = vsub.f32 %v1917, %v1918
      %v1920 = vand.u32 %v1919, 4294901760
      %1921 = vmatpush1.msra.mxu0 %v1920
      %1922 = vmatprep.subr.mxu0 0.0
      %v1923 = vand.u32 %v1790, 4294901760
      %v1924 = vsub.f32 %v1790, %v1923
      %v1925 = vand.u32 %v1924, 4294901760
      %v1926 = vsub.f32 %v1924, %v1925
      %v1927 = vand.u32 %v1926, 4294901760
      %1928 = vmatpush1.msra.mxu0 %v1927
      %1929 = vmatprep.subr.mxu0 0.0
      %v1930 = vand.u32 %v1791, 4294901760
      %v1931 = vsub.f32 %v1791, %v1930
      %v1932 = vand.u32 %v1931, 4294901760
      %v1933 = vsub.f32 %v1931, %v1932
      %v1934 = vand.u32 %v1933, 4294901760
      %1935 = vmatpush1.msra.mxu0 %v1934
      %1936 = vmatprep.subr.mxu0 0.0
      %v1937 = vand.u32 %v1792, 4294901760
      %v1938 = vsub.f32 %v1792, %v1937
      %v1939 = vand.u32 %v1938, 4294901760
      %v1940 = vsub.f32 %v1938, %v1939
      %v1941 = vand.u32 %v1940, 4294901760
      %1942 = vmatpush1.msra.mxu0 %v1941
      %1943 = vmatprep.subr.mxu0 0.0
      %1944 = vmatpush1.msra.mxu0 0.0
      %1945 = vmatprep.subr.mxu0 0.0
      %1946 = vmatpush1.msra.mxu0 0.0
      %1947 = vmatprep.subr.mxu0 0.0
      %1948 = vmatpush1.msra.mxu0 0.0
      %1949 = vmatprep.subr.mxu0 0.0
      %1950 = vmatpush1.msra.mxu0 0.0
      %1951 = vmatprep.subr.mxu0 0.0
      %1952 = vmatpush1.msra.mxu0 0.0
      %1953 = vmatprep.subr.mxu0 0.0
      %1954 = vmatpush1.msra.mxu0 0.0
      %1955 = vmatprep.subr.mxu0 0.0
      %1956 = vmatpush1.msra.mxu0 0.0
      %1957 = vmatprep.subr.mxu0 0.0
      %1958 = vmatpush1.msra.mxu0 0.0
      %1959 = vmatprep.subr.mxu0 0.0
      %1960 = vmatpush1.msra.mxu0 0.0
      %1961 = vmatprep.subr.mxu0 0.0
      %1962 = vmatpush1.msra.mxu0 0.0
      %1963 = vmatprep.subr.mxu0 0.0
      %1964 = vmatpush1.msra.mxu0 0.0
      %1965 = vmatprep.subr.mxu0 0.0
      %1966 = vmatpush1.msra.mxu0 0.0
      %1967 = vmatprep.subr.mxu0 0.0
      %1968 = vmatpush1.msra.mxu0 0.0
      %1969 = vmatprep.subr.mxu0 0.0
      %1970 = vmatpush1.msra.mxu0 0.0
      %1971 = vmatprep.subr.mxu0 0.0
      %1972 = vmatpush1.msra.mxu0 0.0
      %1973 = vmatprep.subr.mxu0 0.0
      %1974 = vmatpush1.msra.mxu0 0.0
      %1975 = vmatprep.subr.mxu0 0.0
      %1976 = vmatpush1.msra.mxu0 0.0
      %1977 = vmatprep.subr.mxu0 0.0
      %1978 = vmatpush1.msra.mxu0 0.0
      %1979 = vmatprep.subr.mxu0 0.0
      %1980 = vmatpush1.msra.mxu0 0.0
      %1981 = vmatprep.subr.mxu0 0.0
      %1982 = vmatpush1.msra.mxu0 0.0
      %1983 = vmatprep.subr.mxu0 0.0
      %1984 = vmatpush1.msra.mxu0 0.0
      %1985 = vmatprep.subr.mxu0 0.0
      %1986 = vmatpush1.msra.mxu0 0.0
      %1987 = vmatprep.subr.mxu0 0.0
      %1988 = vmatpush1.msra.mxu0 0.0
      %1989 = vmatprep.subr.mxu0 0.0
      %1990 = vmatpush1.msra.mxu0 0.0
      %1991 = vmatprep.mubr.f32.mxu0 0.0
      %v1992 = vand.u32 %v1802, 4294901760
      %1993 = vmatmul.mubr.f32.gmra.mrb[0].mxu0 %v1992
      %v1994 = vpop.f32.mrb[0].mxu0
      %v1995 = vadd.f32 %v1884, %v1994
      %v1996 = vpop.f32.mrb[0].mxu0
      %1997 = vdwg.mxu0
      %1998 = vmatprep.subr.mxu0 0.0
      %v1999 = vand.u32 %v1785, 4294901760
      %v2000 = vsub.f32 %v1785, %v1999
      %2001 = vmatpush1.msra.mxu0 %v2000
      %2002 = vmatprep.subr.mxu0 0.0
      %v2003 = vand.u32 %v1786, 4294901760
      %v2004 = vsub.f32 %v1786, %v2003
      %2005 = vmatpush1.msra.mxu0 %v2004
      %2006 = vmatprep.subr.mxu0 0.0
      %v2007 = vand.u32 %v1787, 4294901760
      %v2008 = vsub.f32 %v1787, %v2007
      %2009 = vmatpush1.msra.mxu0 %v2008
      %2010 = vmatprep.subr.mxu0 0.0
      %v2011 = vand.u32 %v1788, 4294901760
      %v2012 = vsub.f32 %v1788, %v2011
      %2013 = vmatpush1.msra.mxu0 %v2012
      %2014 = vmatprep.subr.mxu0 0.0
      %v2015 = vand.u32 %v1789, 4294901760
      %v2016 = vsub.f32 %v1789, %v2015
      %2017 = vmatpush1.msra.mxu0 %v2016
      %2018 = vmatprep.subr.mxu0 0.0
      %v2019 = vand.u32 %v1790, 4294901760
      %v2020 = vsub.f32 %v1790, %v2019
      %2021 = vmatpush1.msra.mxu0 %v2020
      %2022 = vmatprep.subr.mxu0 0.0
      %v2023 = vand.u32 %v1791, 4294901760
      %v2024 = vsub.f32 %v1791, %v2023
      %2025 = vmatpush1.msra.mxu0 %v2024
      %2026 = vmatprep.subr.mxu0 0.0
      %v2027 = vand.u32 %v1792, 4294901760
      %v2028 = vsub.f32 %v1792, %v2027
      %2029 = vmatpush1.msra.mxu0 %v2028
      %2030 = vmatprep.subr.mxu0 0.0
      %2031 = vmatpush1.msra.mxu0 0.0
      %2032 = vmatprep.subr.mxu0 0.0
      %2033 = vmatpush1.msra.mxu0 0.0
      %2034 = vmatprep.subr.mxu0 0.0
      %2035 = vmatpush1.msra.mxu0 0.0
      %2036 = vmatprep.subr.mxu0 0.0
      %2037 = vmatpush1.msra.mxu0 0.0
      %2038 = vmatprep.subr.mxu0 0.0
      %2039 = vmatpush1.msra.mxu0 0.0
      %2040 = vmatprep.subr.mxu0 0.0
      %2041 = vmatpush1.msra.mxu0 0.0
      %2042 = vmatprep.subr.mxu0 0.0
      %2043 = vmatpush1.msra.mxu0 0.0
      %2044 = vmatprep.subr.mxu0 0.0
      %2045 = vmatpush1.msra.mxu0 0.0
      %2046 = vmatprep.subr.mxu0 0.0
      %2047 = vmatpush1.msra.mxu0 0.0
      %2048 = vmatprep.subr.mxu0 0.0
      %2049 = vmatpush1.msra.mxu0 0.0
      %2050 = vmatprep.subr.mxu0 0.0
      %2051 = vmatpush1.msra.mxu0 0.0
      %2052 = vmatprep.subr.mxu0 0.0
      %2053 = vmatpush1.msra.mxu0 0.0
      %2054 = vmatprep.subr.mxu0 0.0
      %2055 = vmatpush1.msra.mxu0 0.0
      %2056 = vmatprep.subr.mxu0 0.0
      %2057 = vmatpush1.msra.mxu0 0.0
      %2058 = vmatprep.subr.mxu0 0.0
      %2059 = vmatpush1.msra.mxu0 0.0
      %2060 = vmatprep.subr.mxu0 0.0
      %2061 = vmatpush1.msra.mxu0 0.0
      %2062 = vmatprep.subr.mxu0 0.0
      %2063 = vmatpush1.msra.mxu0 0.0
      %2064 = vmatprep.subr.mxu0 0.0
      %2065 = vmatpush1.msra.mxu0 0.0
      %2066 = vmatprep.subr.mxu0 0.0
      %2067 = vmatpush1.msra.mxu0 0.0
      %2068 = vmatprep.subr.mxu0 0.0
      %2069 = vmatpush1.msra.mxu0 0.0
      %2070 = vmatprep.subr.mxu0 0.0
      %2071 = vmatpush1.msra.mxu0 0.0
      %2072 = vmatprep.subr.mxu0 0.0
      %2073 = vmatpush1.msra.mxu0 0.0
      %2074 = vmatprep.subr.mxu0 0.0
      %2075 = vmatpush1.msra.mxu0 0.0
      %2076 = vmatprep.subr.mxu0 0.0
      %2077 = vmatpush1.msra.mxu0 0.0
      %2078 = vmatprep.mubr.f32.mxu0 0.0
      %v2079 = vand.u32 %v1802, 4294901760
      %v2080 = vsub.f32 %v1802, %v2079
      %2081 = vmatmul.mubr.f32.gmra.mrb[0].mxu0 %v2080
      %v2082 = vpop.f32.mrb[0].mxu0
      %v2083 = vadd.f32 %v1995, %v2082
      %v2084 = vpop.f32.mrb[0].mxu0
      %2085 = vdwg.mxu0
      %2086 = vmatprep.subr.mxu0 0.0
      %v2087 = vand.u32 %v1785, 4294901760
      %2088 = vmatpush1.msra.mxu0 %v2087
      %2089 = vmatprep.subr.mxu0 0.0
      %v2090 = vand.u32 %v1786, 4294901760
      %2091 = vmatpush1.msra.mxu0 %v2090
      %2092 = vmatprep.subr.mxu0 0.0
      %v2093 = vand.u32 %v1787, 4294901760
      %2094 = vmatpush1.msra.mxu0 %v2093
      %2095 = vmatprep.subr.mxu0 0.0
      %v2096 = vand.u32 %v1788, 4294901760
      %2097 = vmatpush1.msra.mxu0 %v2096
      %2098 = vmatprep.subr.mxu0 0.0
      %v2099 = vand.u32 %v1789, 4294901760
      %2100 = vmatpush1.msra.mxu0 %v2099
      %2101 = vmatprep.subr.mxu0 0.0
      %v2102 = vand.u32 %v1790, 4294901760
      %2103 = vmatpush1.msra.mxu0 %v2102
      %2104 = vmatprep.subr.mxu0 0.0
      %v2105 = vand.u32 %v1791, 4294901760
      %2106 = vmatpush1.msra.mxu0 %v2105
      %2107 = vmatprep.subr.mxu0 0.0
      %v2108 = vand.u32 %v1792, 4294901760
      %2109 = vmatpush1.msra.mxu0 %v2108
      %2110 = vmatprep.subr.mxu0 0.0
      %2111 = vmatpush1.msra.mxu0 0.0
      %2112 = vmatprep.subr.mxu0 0.0
      %2113 = vmatpush1.msra.mxu0 0.0
      %2114 = vmatprep.subr.mxu0 0.0
      %2115 = vmatpush1.msra.mxu0 0.0
      %2116 = vmatprep.subr.mxu0 0.0
      %2117 = vmatpush1.msra.mxu0 0.0
      %2118 = vmatprep.subr.mxu0 0.0
      %2119 = vmatpush1.msra.mxu0 0.0
      %2120 = vmatprep.subr.mxu0 0.0
      %2121 = vmatpush1.msra.mxu0 0.0
      %2122 = vmatprep.subr.mxu0 0.0
      %2123 = vmatpush1.msra.mxu0 0.0
      %2124 = vmatprep.subr.mxu0 0.0
      %2125 = vmatpush1.msra.mxu0 0.0
      %2126 = vmatprep.subr.mxu0 0.0
      %2127 = vmatpush1.msra.mxu0 0.0
      %2128 = vmatprep.subr.mxu0 0.0
      %2129 = vmatpush1.msra.mxu0 0.0
      %2130 = vmatprep.subr.mxu0 0.0
      %2131 = vmatpush1.msra.mxu0 0.0
      %2132 = vmatprep.subr.mxu0 0.0
      %2133 = vmatpush1.msra.mxu0 0.0
      %2134 = vmatprep.subr.mxu0 0.0
      %2135 = vmatpush1.msra.mxu0 0.0
      %2136 = vmatprep.subr.mxu0 0.0
      %2137 = vmatpush1.msra.mxu0 0.0
      %2138 = vmatprep.subr.mxu0 0.0
      %2139 = vmatpush1.msra.mxu0 0.0
      %2140 = vmatprep.subr.mxu0 0.0
      %2141 = vmatpush1.msra.mxu0 0.0
      %2142 = vmatprep.subr.mxu0 0.0
      %2143 = vmatpush1.msra.mxu0 0.0
      %2144 = vmatprep.subr.mxu0 0.0
      %2145 = vmatpush1.msra.mxu0 0.0
      %2146 = vmatprep.subr.mxu0 0.0
      %2147 = vmatpush1.msra.mxu0 0.0
      %2148 = vmatprep.subr.mxu0 0.0
      %2149 = vmatpush1.msra.mxu0 0.0
      %2150 = vmatprep.subr.mxu0 0.0
      %2151 = vmatpush1.msra.mxu0 0.0
      %2152 = vmatprep.subr.mxu0 0.0
      %2153 = vmatpush1.msra.mxu0 0.0
      %2154 = vmatprep.subr.mxu0 0.0
      %2155 = vmatpush1.msra.mxu0 0.0
      %2156 = vmatprep.subr.mxu0 0.0
      %2157 = vmatpush1.msra.mxu0 0.0
      %2158 = vmatprep.mubr.f32.mxu0 0.0
      %v2159 = vand.u32 %v1802, 4294901760
      %v2160 = vsub.f32 %v1802, %v2159
      %v2161 = vand.u32 %v2160, 4294901760
      %2162 = vmatmul.mubr.f32.gmra.mrb[0].mxu0 %v2161
      %v2163 = vpop.f32.mrb[0].mxu0
      %v2164 = vadd.f32 %v2083, %v2163
      %v2165 = vpop.f32.mrb[0].mxu0
      %2166 = vdwg.mxu0
      %2167 = vmatprep.subr.mxu0 0.0
      %v2168 = vand.u32 %v1785, 4294901760
      %v2169 = vsub.f32 %v1785, %v2168
      %v2170 = vand.u32 %v2169, 4294901760
      %2171 = vmatpush1.msra.mxu0 %v2170
      %2172 = vmatprep.subr.mxu0 0.0
      %v2173 = vand.u32 %v1786, 4294901760
      %v2174 = vsub.f32 %v1786, %v2173
      %v2175 = vand.u32 %v2174, 4294901760
      %2176 = vmatpush1.msra.mxu0 %v2175
      %2177 = vmatprep.subr.mxu0 0.0
      %v2178 = vand.u32 %v1787, 4294901760
      %v2179 = vsub.f32 %v1787, %v2178
      %v2180 = vand.u32 %v2179, 4294901760
      %2181 = vmatpush1.msra.mxu0 %v2180
      %2182 = vmatprep.subr.mxu0 0.0
      %v2183 = vand.u32 %v1788, 4294901760
      %v2184 = vsub.f32 %v1788, %v2183
      %v2185 = vand.u32 %v2184, 4294901760
      %2186 = vmatpush1.msra.mxu0 %v2185
      %2187 = vmatprep.subr.mxu0 0.0
      %v2188 = vand.u32 %v1789, 4294901760
      %v2189 = vsub.f32 %v1789, %v2188
      %v2190 = vand.u32 %v2189, 4294901760
      %2191 = vmatpush1.msra.mxu0 %v2190
      %2192 = vmatprep.subr.mxu0 0.0
      %v2193 = vand.u32 %v1790, 4294901760
      %v2194 = vsub.f32 %v1790, %v2193
      %v2195 = vand.u32 %v2194, 4294901760
      %2196 = vmatpush1.msra.mxu0 %v2195
      %2197 = vmatprep.subr.mxu0 0.0
      %v2198 = vand.u32 %v1791, 4294901760
      %v2199 = vsub.f32 %v1791, %v2198
      %v2200 = vand.u32 %v2199, 4294901760
      %2201 = vmatpush1.msra.mxu0 %v2200
      %2202 = vmatprep.subr.mxu0 0.0
      %v2203 = vand.u32 %v1792, 4294901760
      %v2204 = vsub.f32 %v1792, %v2203
      %v2205 = vand.u32 %v2204, 4294901760
      %2206 = vmatpush1.msra.mxu0 %v2205
      %2207 = vmatprep.subr.mxu0 0.0
      %2208 = vmatpush1.msra.mxu0 0.0
      %2209 = vmatprep.subr.mxu0 0.0
      %2210 = vmatpush1.msra.mxu0 0.0
      %2211 = vmatprep.subr.mxu0 0.0
      %2212 = vmatpush1.msra.mxu0 0.0
      %2213 = vmatprep.subr.mxu0 0.0
      %2214 = vmatpush1.msra.mxu0 0.0
      %2215 = vmatprep.subr.mxu0 0.0
      %2216 = vmatpush1.msra.mxu0 0.0
      %2217 = vmatprep.subr.mxu0 0.0
      %2218 = vmatpush1.msra.mxu0 0.0
      %2219 = vmatprep.subr.mxu0 0.0
      %2220 = vmatpush1.msra.mxu0 0.0
      %2221 = vmatprep.subr.mxu0 0.0
      %2222 = vmatpush1.msra.mxu0 0.0
      %2223 = vmatprep.subr.mxu0 0.0
      %2224 = vmatpush1.msra.mxu0 0.0
      %2225 = vmatprep.subr.mxu0 0.0
      %2226 = vmatpush1.msra.mxu0 0.0
      %2227 = vmatprep.subr.mxu0 0.0
      %2228 = vmatpush1.msra.mxu0 0.0
      %2229 = vmatprep.subr.mxu0 0.0
      %2230 = vmatpush1.msra.mxu0 0.0
      %2231 = vmatprep.subr.mxu0 0.0
      %2232 = vmatpush1.msra.mxu0 0.0
      %2233 = vmatprep.subr.mxu0 0.0
      %2234 = vmatpush1.msra.mxu0 0.0
      %2235 = vmatprep.subr.mxu0 0.0
      %2236 = vmatpush1.msra.mxu0 0.0
      %2237 = vmatprep.subr.mxu0 0.0
      %2238 = vmatpush1.msra.mxu0 0.0
      %2239 = vmatprep.subr.mxu0 0.0
      %2240 = vmatpush1.msra.mxu0 0.0
      %2241 = vmatprep.subr.mxu0 0.0
      %2242 = vmatpush1.msra.mxu0 0.0
      %2243 = vmatprep.subr.mxu0 0.0
      %2244 = vmatpush1.msra.mxu0 0.0
      %2245 = vmatprep.subr.mxu0 0.0
      %2246 = vmatpush1.msra.mxu0 0.0
      %2247 = vmatprep.subr.mxu0 0.0
      %2248 = vmatpush1.msra.mxu0 0.0
      %2249 = vmatprep.subr.mxu0 0.0
      %2250 = vmatpush1.msra.mxu0 0.0
      %2251 = vmatprep.subr.mxu0 0.0
      %2252 = vmatpush1.msra.mxu0 0.0
      %2253 = vmatprep.subr.mxu0 0.0
      %2254 = vmatpush1.msra.mxu0 0.0
      %2255 = vmatprep.mubr.f32.mxu0 0.0
      %v2256 = vand.u32 %v1802, 4294901760
      %2257 = vmatmul.mubr.f32.gmra.mrb[0].mxu0 %v2256
      %v2258 = vpop.f32.mrb[0].mxu0
      %v2259 = vadd.f32 %v2164, %v2258
      %v2260 = vpop.f32.mrb[0].mxu0
      %2261 = vdwg.mxu0
      %2262 = vmatprep.subr.mxu0 0.0
      %v2263 = vand.u32 %v1785, 4294901760
      %2264 = vmatpush1.msra.mxu0 %v2263
      %2265 = vmatprep.subr.mxu0 0.0
      %v2266 = vand.u32 %v1786, 4294901760
      %2267 = vmatpush1.msra.mxu0 %v2266
      %2268 = vmatprep.subr.mxu0 0.0
      %v2269 = vand.u32 %v1787, 4294901760
      %2270 = vmatpush1.msra.mxu0 %v2269
      %2271 = vmatprep.subr.mxu0 0.0
      %v2272 = vand.u32 %v1788, 4294901760
      %2273 = vmatpush1.msra.mxu0 %v2272
      %2274 = vmatprep.subr.mxu0 0.0
      %v2275 = vand.u32 %v1789, 4294901760
      %2276 = vmatpush1.msra.mxu0 %v2275
      %2277 = vmatprep.subr.mxu0 0.0
      %v2278 = vand.u32 %v1790, 4294901760
      %2279 = vmatpush1.msra.mxu0 %v2278
      %2280 = vmatprep.subr.mxu0 0.0
      %v2281 = vand.u32 %v1791, 4294901760
      %2282 = vmatpush1.msra.mxu0 %v2281
      %2283 = vmatprep.subr.mxu0 0.0
      %v2284 = vand.u32 %v1792, 4294901760
      %2285 = vmatpush1.msra.mxu0 %v2284
      %2286 = vmatprep.subr.mxu0 0.0
      %2287 = vmatpush1.msra.mxu0 0.0
      %2288 = vmatprep.subr.mxu0 0.0
      %2289 = vmatpush1.msra.mxu0 0.0
      %2290 = vmatprep.subr.mxu0 0.0
      %2291 = vmatpush1.msra.mxu0 0.0
      %2292 = vmatprep.subr.mxu0 0.0
      %2293 = vmatpush1.msra.mxu0 0.0
      %2294 = vmatprep.subr.mxu0 0.0
      %2295 = vmatpush1.msra.mxu0 0.0
      %2296 = vmatprep.subr.mxu0 0.0
      %2297 = vmatpush1.msra.mxu0 0.0
      %2298 = vmatprep.subr.mxu0 0.0
      %2299 = vmatpush1.msra.mxu0 0.0
      %2300 = vmatprep.subr.mxu0 0.0
      %2301 = vmatpush1.msra.mxu0 0.0
      %2302 = vmatprep.subr.mxu0 0.0
      %2303 = vmatpush1.msra.mxu0 0.0
      %2304 = vmatprep.subr.mxu0 0.0
      %2305 = vmatpush1.msra.mxu0 0.0
      %2306 = vmatprep.subr.mxu0 0.0
      %2307 = vmatpush1.msra.mxu0 0.0
      %2308 = vmatprep.subr.mxu0 0.0
      %2309 = vmatpush1.msra.mxu0 0.0
      %2310 = vmatprep.subr.mxu0 0.0
      %2311 = vmatpush1.msra.mxu0 0.0
      %2312 = vmatprep.subr.mxu0 0.0
      %2313 = vmatpush1.msra.mxu0 0.0
      %2314 = vmatprep.subr.mxu0 0.0
      %2315 = vmatpush1.msra.mxu0 0.0
      %2316 = vmatprep.subr.mxu0 0.0
      %2317 = vmatpush1.msra.mxu0 0.0
      %2318 = vmatprep.subr.mxu0 0.0
      %2319 = vmatpush1.msra.mxu0 0.0
      %2320 = vmatprep.subr.mxu0 0.0
      %2321 = vmatpush1.msra.mxu0 0.0
      %2322 = vmatprep.subr.mxu0 0.0
      %2323 = vmatpush1.msra.mxu0 0.0
      %2324 = vmatprep.subr.mxu0 0.0
      %2325 = vmatpush1.msra.mxu0 0.0
      %2326 = vmatprep.subr.mxu0 0.0
      %2327 = vmatpush1.msra.mxu0 0.0
      %2328 = vmatprep.subr.mxu0 0.0
      %2329 = vmatpush1.msra.mxu0 0.0
      %2330 = vmatprep.subr.mxu0 0.0
      %2331 = vmatpush1.msra.mxu0 0.0
      %2332 = vmatprep.subr.mxu0 0.0
      %2333 = vmatpush1.msra.mxu0 0.0
      %2334 = vmatprep.mubr.f32.mxu0 0.0
      %v2335 = vand.u32 %v1802, 4294901760
      %2336 = vmatmul.mubr.f32.gmra.mrb[0].mxu0 %v2335
      %v2337 = vpop.f32.mrb[0].mxu0
      %v2338 = vadd.f32 %v2259, %v2337
      %v2339 = vpop.f32.mrb[0].mxu0
      %2340 = vdwg.mxu0
      %v2341 = vlaneseq
      %v2342 = vand.u32 %v2341, 127
      %vm2343 = vcmp.lt.s32.totalorder %v2342, 64
      %vm2344 = vcmp.ge.f32.partialorder %v2338, 0.0
      %v2345 = vmul.f32 %v2338, 0.01
      %v2346 = vsel %vm2344, %v2338, %v2345
      %v2347 = vsel %vm2343, %v2346, %v2338
      %v2348 = vld [vmem:[%s7] sm:$0xff]
      %v2349 = vld [vmem:[%s7 + $0x8] sm:$0xff]
      %v2350 = vld [vmem:[%s7 + $0x10] sm:$0xff]
      %v2351 = vld [vmem:[%s7 + $0x18] sm:$0xff]
      %v2352 = vld [vmem:[%s7 + $0x20] sm:$0xff]
      %v2353 = vld [vmem:[%s7 + $0x28] sm:$0xff]
      %v2354 = vld [vmem:[%s7 + $0x30] sm:$0xff]
      %v2355 = vld [vmem:[%s7 + $0x38] sm:$0xff]
      %v2356 = vld [vmem:[%s7 + $0x40] sm:$0xff]
      %v2357 = vld [vmem:[%s7 + $0x48] sm:$0xff]
      %v2358 = vld [vmem:[%s8] sm:$0x1]
      %v2360 = vlaneseq
      %v2361 = vshrl.u32 %v2360, 7
      %v2362 = vsub.s32 0, %v2361
      %v2363 = vrot.slane %v2358, %v2362
      %vm2365 = vcmask 654336
      %v2367 = vsel %vm2365, %v2347, 0
      %2369 = vmatprep.subr.mxu0 0.0
      %v2370 = vand.u32 %v2348, 4294901760
      %2371 = vmatpush1.msra.mxu0 %v2370
      %2372 = vmatprep.subr.mxu0 0.0
      %v2373 = vand.u32 %v2349, 4294901760
      %2374 = vmatpush1.msra.mxu0 %v2373
      %2375 = vmatprep.subr.mxu0 0.0
      %v2376 = vand.u32 %v2350, 4294901760
      %2377 = vmatpush1.msra.mxu0 %v2376
      %2378 = vmatprep.subr.mxu0 0.0
      %v2379 = vand.u32 %v2351, 4294901760
      %2380 = vmatpush1.msra.mxu0 %v2379
      %2381 = vmatprep.subr.mxu0 0.0
      %v2382 = vand.u32 %v2352, 4294901760
      %2383 = vmatpush1.msra.mxu0 %v2382
      %2384 = vmatprep.subr.mxu0 0.0
      %v2385 = vand.u32 %v2353, 4294901760
      %2386 = vmatpush1.msra.mxu0 %v2385
      %2387 = vmatprep.subr.mxu0 0.0
      %v2388 = vand.u32 %v2354, 4294901760
      %2389 = vmatpush1.msra.mxu0 %v2388
      %2390 = vmatprep.subr.mxu0 0.0
      %v2391 = vand.u32 %v2355, 4294901760
      %2392 = vmatpush1.msra.mxu0 %v2391
      %2393 = vmatprep.subr.mxu0 0.0
      %v2394 = vand.u32 %v2356, 4294901760
      %2395 = vmatpush1.msra.mxu0 %v2394
      %2396 = vmatprep.subr.mxu0 0.0
      %v2397 = vand.u32 %v2357, 4294901760
      %2398 = vmatpush1.msra.mxu0 %v2397
      %2399 = vmatprep.subr.mxu0 0.0
      %2400 = vmatpush1.msra.mxu0 0.0
      %2401 = vmatprep.subr.mxu0 0.0
      %2402 = vmatpush1.msra.mxu0 0.0
      %2403 = vmatprep.subr.mxu0 0.0
      %2404 = vmatpush1.msra.mxu0 0.0
      %2405 = vmatprep.subr.mxu0 0.0
      %2406 = vmatpush1.msra.mxu0 0.0
      %2407 = vmatprep.subr.mxu0 0.0
      %2408 = vmatpush1.msra.mxu0 0.0
      %2409 = vmatprep.subr.mxu0 0.0
      %2410 = vmatpush1.msra.mxu0 0.0
      %2411 = vmatprep.subr.mxu0 0.0
      %2412 = vmatpush1.msra.mxu0 0.0
      %2413 = vmatprep.subr.mxu0 0.0
      %2414 = vmatpush1.msra.mxu0 0.0
      %2415 = vmatprep.subr.mxu0 0.0
      %2416 = vmatpush1.msra.mxu0 0.0
      %2417 = vmatprep.subr.mxu0 0.0
      %2418 = vmatpush1.msra.mxu0 0.0
      %2419 = vmatprep.subr.mxu0 0.0
      %2420 = vmatpush1.msra.mxu0 0.0
      %2421 = vmatprep.subr.mxu0 0.0
      %2422 = vmatpush1.msra.mxu0 0.0
      %2423 = vmatprep.subr.mxu0 0.0
      %2424 = vmatpush1.msra.mxu0 0.0
      %2425 = vmatprep.subr.mxu0 0.0
      %2426 = vmatpush1.msra.mxu0 0.0
      %2427 = vmatprep.subr.mxu0 0.0
      %2428 = vmatpush1.msra.mxu0 0.0
      %2429 = vmatprep.subr.mxu0 0.0
      %2430 = vmatpush1.msra.mxu0 0.0
      %2431 = vmatprep.subr.mxu0 0.0
      %2432 = vmatpush1.msra.mxu0 0.0
      %2433 = vmatprep.subr.mxu0 0.0
      %2434 = vmatpush1.msra.mxu0 0.0
      %2435 = vmatprep.subr.mxu0 0.0
      %2436 = vmatpush1.msra.mxu0 0.0
      %2437 = vmatprep.subr.mxu0 0.0
      %2438 = vmatpush1.msra.mxu0 0.0
      %2439 = vmatprep.subr.mxu0 0.0
      %2440 = vmatpush1.msra.mxu0 0.0
      %2441 = vmatprep.subr.mxu0 0.0
      %2442 = vmatpush1.msra.mxu0 0.0
      %2443 = vmatprep.mubr.f32.mxu0 0.0
      %v2444 = vand.u32 %v2367, 4294901760
      %v2445 = vsub.f32 %v2367, %v2444
      %v2446 = vand.u32 %v2445, 4294901760
      %v2447 = vsub.f32 %v2445, %v2446
      %v2448 = vand.u32 %v2447, 4294901760
      %2449 = vmatmul.mubr.f32.gmra.mrb[0].mxu0 %v2448
      %v2450 = vpop.f32.mrb[0].mxu0
      %v2451 = vadd.f32 %v2363, %v2450
      %v2452 = vpop.f32.mrb[0].mxu0
      %2453 = vdwg.mxu0
      %2454 = vmatprep.subr.mxu0 0.0
      %v2455 = vand.u32 %v2348, 4294901760
      %v2456 = vsub.f32 %v2348, %v2455
      %v2457 = vand.u32 %v2456, 4294901760
      %v2458 = vsub.f32 %v2456, %v2457
      %v2459 = vand.u32 %v2458, 4294901760
      %2460 = vmatpush1.msra.mxu0 %v2459
      %2461 = vmatprep.subr.mxu0 0.0
      %v2462 = vand.u32 %v2349, 4294901760
      %v2463 = vsub.f32 %v2349, %v2462
      %v2464 = vand.u32 %v2463, 4294901760
      %v2465 = vsub.f32 %v2463, %v2464
      %v2466 = vand.u32 %v2465, 4294901760
      %2467 = vmatpush1.msra.mxu0 %v2466
      %2468 = vmatprep.subr.mxu0 0.0
      %v2469 = vand.u32 %v2350, 4294901760
      %v2470 = vsub.f32 %v2350, %v2469
      %v2471 = vand.u32 %v2470, 4294901760
      %v2472 = vsub.f32 %v2470, %v2471
      %v2473 = vand.u32 %v2472, 4294901760
      %2474 = vmatpush1.msra.mxu0 %v2473
      %2475 = vmatprep.subr.mxu0 0.0
      %v2476 = vand.u32 %v2351, 4294901760
      %v2477 = vsub.f32 %v2351, %v2476
      %v2478 = vand.u32 %v2477, 4294901760
      %v2479 = vsub.f32 %v2477, %v2478
      %v2480 = vand.u32 %v2479, 4294901760
      %2481 = vmatpush1.msra.mxu0 %v2480
      %2482 = vmatprep.subr.mxu0 0.0
      %v2483 = vand.u32 %v2352, 4294901760
      %v2484 = vsub.f32 %v2352, %v2483
      %v2485 = vand.u32 %v2484, 4294901760
      %v2486 = vsub.f32 %v2484, %v2485
      %v2487 = vand.u32 %v2486, 4294901760
      %2488 = vmatpush1.msra.mxu0 %v2487
      %2489 = vmatprep.subr.mxu0 0.0
      %v2490 = vand.u32 %v2353, 4294901760
      %v2491 = vsub.f32 %v2353, %v2490
      %v2492 = vand.u32 %v2491, 4294901760
      %v2493 = vsub.f32 %v2491, %v2492
      %v2494 = vand.u32 %v2493, 4294901760
      %2495 = vmatpush1.msra.mxu0 %v2494
      %2496 = vmatprep.subr.mxu0 0.0
      %v2497 = vand.u32 %v2354, 4294901760
      %v2498 = vsub.f32 %v2354, %v2497
      %v2499 = vand.u32 %v2498, 4294901760
      %v2500 = vsub.f32 %v2498, %v2499
      %v2501 = vand.u32 %v2500, 4294901760
      %2502 = vmatpush1.msra.mxu0 %v2501
      %2503 = vmatprep.subr.mxu0 0.0
      %v2504 = vand.u32 %v2355, 4294901760
      %v2505 = vsub.f32 %v2355, %v2504
      %v2506 = vand.u32 %v2505, 4294901760
      %v2507 = vsub.f32 %v2505, %v2506
      %v2508 = vand.u32 %v2507, 4294901760
      %2509 = vmatpush1.msra.mxu0 %v2508
      %2510 = vmatprep.subr.mxu0 0.0
      %v2511 = vand.u32 %v2356, 4294901760
      %v2512 = vsub.f32 %v2356, %v2511
      %v2513 = vand.u32 %v2512, 4294901760
      %v2514 = vsub.f32 %v2512, %v2513
      %v2515 = vand.u32 %v2514, 4294901760
      %2516 = vmatpush1.msra.mxu0 %v2515
      %2517 = vmatprep.subr.mxu0 0.0
      %v2518 = vand.u32 %v2357, 4294901760
      %v2519 = vsub.f32 %v2357, %v2518
      %v2520 = vand.u32 %v2519, 4294901760
      %v2521 = vsub.f32 %v2519, %v2520
      %v2522 = vand.u32 %v2521, 4294901760
      %2523 = vmatpush1.msra.mxu0 %v2522
      %2524 = vmatprep.subr.mxu0 0.0
      %2525 = vmatpush1.msra.mxu0 0.0
      %2526 = vmatprep.subr.mxu0 0.0
      %2527 = vmatpush1.msra.mxu0 0.0
      %2528 = vmatprep.subr.mxu0 0.0
      %2529 = vmatpush1.msra.mxu0 0.0
      %2530 = vmatprep.subr.mxu0 0.0
      %2531 = vmatpush1.msra.mxu0 0.0
      %2532 = vmatprep.subr.mxu0 0.0
      %2533 = vmatpush1.msra.mxu0 0.0
      %2534 = vmatprep.subr.mxu0 0.0
      %2535 = vmatpush1.msra.mxu0 0.0
      %2536 = vmatprep.subr.mxu0 0.0
      %2537 = vmatpush1.msra.mxu0 0.0
      %2538 = vmatprep.subr.mxu0 0.0
      %2539 = vmatpush1.msra.mxu0 0.0
      %2540 = vmatprep.subr.mxu0 0.0
      %2541 = vmatpush1.msra.mxu0 0.0
      %2542 = vmatprep.subr.mxu0 0.0
      %2543 = vmatpush1.msra.mxu0 0.0
      %2544 = vmatprep.subr.mxu0 0.0
      %2545 = vmatpush1.msra.mxu0 0.0
      %2546 = vmatprep.subr.mxu0 0.0
      %2547 = vmatpush1.msra.mxu0 0.0
      %2548 = vmatprep.subr.mxu0 0.0
      %2549 = vmatpush1.msra.mxu0 0.0
      %2550 = vmatprep.subr.mxu0 0.0
      %2551 = vmatpush1.msra.mxu0 0.0
      %2552 = vmatprep.subr.mxu0 0.0
      %2553 = vmatpush1.msra.mxu0 0.0
      %2554 = vmatprep.subr.mxu0 0.0
      %2555 = vmatpush1.msra.mxu0 0.0
      %2556 = vmatprep.subr.mxu0 0.0
      %2557 = vmatpush1.msra.mxu0 0.0
      %2558 = vmatprep.subr.mxu0 0.0
      %2559 = vmatpush1.msra.mxu0 0.0
      %2560 = vmatprep.subr.mxu0 0.0
      %2561 = vmatpush1.msra.mxu0 0.0
      %2562 = vmatprep.subr.mxu0 0.0
      %2563 = vmatpush1.msra.mxu0 0.0
      %2564 = vmatprep.subr.mxu0 0.0
      %2565 = vmatpush1.msra.mxu0 0.0
      %2566 = vmatprep.subr.mxu0 0.0
      %2567 = vmatpush1.msra.mxu0 0.0
      %2568 = vmatprep.mubr.f32.mxu0 0.0
      %v2569 = vand.u32 %v2367, 4294901760
      %2570 = vmatmul.mubr.f32.gmra.mrb[0].mxu0 %v2569
      %v2571 = vpop.f32.mrb[0].mxu0
      %v2572 = vadd.f32 %v2451, %v2571
      %v2573 = vpop.f32.mrb[0].mxu0
      %2574 = vdwg.mxu0
      %2575 = vmatprep.subr.mxu0 0.0
      %v2576 = vand.u32 %v2348, 4294901760
      %v2577 = vsub.f32 %v2348, %v2576
      %2578 = vmatpush1.msra.mxu0 %v2577
      %2579 = vmatprep.subr.mxu0 0.0
      %v2580 = vand.u32 %v2349, 4294901760
      %v2581 = vsub.f32 %v2349, %v2580
      %2582 = vmatpush1.msra.mxu0 %v2581
      %2583 = vmatprep.subr.mxu0 0.0
      %v2584 = vand.u32 %v2350, 4294901760
      %v2585 = vsub.f32 %v2350, %v2584
      %2586 = vmatpush1.msra.mxu0 %v2585
      %2587 = vmatprep.subr.mxu0 0.0
      %v2588 = vand.u32 %v2351, 4294901760
      %v2589 = vsub.f32 %v2351, %v2588
      %2590 = vmatpush1.msra.mxu0 %v2589
      %2591 = vmatprep.subr.mxu0 0.0
      %v2592 = vand.u32 %v2352, 4294901760
      %v2593 = vsub.f32 %v2352, %v2592
      %2594 = vmatpush1.msra.mxu0 %v2593
      %2595 = vmatprep.subr.mxu0 0.0
      %v2596 = vand.u32 %v2353, 4294901760
      %v2597 = vsub.f32 %v2353, %v2596
      %2598 = vmatpush1.msra.mxu0 %v2597
      %2599 = vmatprep.subr.mxu0 0.0
      %v2600 = vand.u32 %v2354, 4294901760
      %v2601 = vsub.f32 %v2354, %v2600
      %2602 = vmatpush1.msra.mxu0 %v2601
      %2603 = vmatprep.subr.mxu0 0.0
      %v2604 = vand.u32 %v2355, 4294901760
      %v2605 = vsub.f32 %v2355, %v2604
      %2606 = vmatpush1.msra.mxu0 %v2605
      %2607 = vmatprep.subr.mxu0 0.0
      %v2608 = vand.u32 %v2356, 4294901760
      %v2609 = vsub.f32 %v2356, %v2608
      %2610 = vmatpush1.msra.mxu0 %v2609
      %2611 = vmatprep.subr.mxu0 0.0
      %v2612 = vand.u32 %v2357, 4294901760
      %v2613 = vsub.f32 %v2357, %v2612
      %2614 = vmatpush1.msra.mxu0 %v2613
      %2615 = vmatprep.subr.mxu0 0.0
      %2616 = vmatpush1.msra.mxu0 0.0
      %2617 = vmatprep.subr.mxu0 0.0
      %2618 = vmatpush1.msra.mxu0 0.0
      %2619 = vmatprep.subr.mxu0 0.0
      %2620 = vmatpush1.msra.mxu0 0.0
      %2621 = vmatprep.subr.mxu0 0.0
      %2622 = vmatpush1.msra.mxu0 0.0
      %2623 = vmatprep.subr.mxu0 0.0
      %2624 = vmatpush1.msra.mxu0 0.0
      %2625 = vmatprep.subr.mxu0 0.0
      %2626 = vmatpush1.msra.mxu0 0.0
      %2627 = vmatprep.subr.mxu0 0.0
      %2628 = vmatpush1.msra.mxu0 0.0
      %2629 = vmatprep.subr.mxu0 0.0
      %2630 = vmatpush1.msra.mxu0 0.0
      %2631 = vmatprep.subr.mxu0 0.0
      %2632 = vmatpush1.msra.mxu0 0.0
      %2633 = vmatprep.subr.mxu0 0.0
      %2634 = vmatpush1.msra.mxu0 0.0
      %2635 = vmatprep.subr.mxu0 0.0
      %2636 = vmatpush1.msra.mxu0 0.0
      %2637 = vmatprep.subr.mxu0 0.0
      %2638 = vmatpush1.msra.mxu0 0.0
      %2639 = vmatprep.subr.mxu0 0.0
      %2640 = vmatpush1.msra.mxu0 0.0
      %2641 = vmatprep.subr.mxu0 0.0
      %2642 = vmatpush1.msra.mxu0 0.0
      %2643 = vmatprep.subr.mxu0 0.0
      %2644 = vmatpush1.msra.mxu0 0.0
      %2645 = vmatprep.subr.mxu0 0.0
      %2646 = vmatpush1.msra.mxu0 0.0
      %2647 = vmatprep.subr.mxu0 0.0
      %2648 = vmatpush1.msra.mxu0 0.0
      %2649 = vmatprep.subr.mxu0 0.0
      %2650 = vmatpush1.msra.mxu0 0.0
      %2651 = vmatprep.subr.mxu0 0.0
      %2652 = vmatpush1.msra.mxu0 0.0
      %2653 = vmatprep.subr.mxu0 0.0
      %2654 = vmatpush1.msra.mxu0 0.0
      %2655 = vmatprep.subr.mxu0 0.0
      %2656 = vmatpush1.msra.mxu0 0.0
      %2657 = vmatprep.subr.mxu0 0.0
      %2658 = vmatpush1.msra.mxu0 0.0
      %2659 = vmatprep.mubr.f32.mxu0 0.0
      %v2660 = vand.u32 %v2367, 4294901760
      %v2661 = vsub.f32 %v2367, %v2660
      %2662 = vmatmul.mubr.f32.gmra.mrb[0].mxu0 %v2661
      %v2663 = vpop.f32.mrb[0].mxu0
      %v2664 = vadd.f32 %v2572, %v2663
      %v2665 = vpop.f32.mrb[0].mxu0
      %2666 = vdwg.mxu0
      %2667 = vmatprep.subr.mxu0 0.0
      %v2668 = vand.u32 %v2348, 4294901760
      %2669 = vmatpush1.msra.mxu0 %v2668
      %2670 = vmatprep.subr.mxu0 0.0
      %v2671 = vand.u32 %v2349, 4294901760
      %2672 = vmatpush1.msra.mxu0 %v2671
      %2673 = vmatprep.subr.mxu0 0.0
      %v2674 = vand.u32 %v2350, 4294901760
      %2675 = vmatpush1.msra.mxu0 %v2674
      %2676 = vmatprep.subr.mxu0 0.0
      %v2677 = vand.u32 %v2351, 4294901760
      %2678 = vmatpush1.msra.mxu0 %v2677
      %2679 = vmatprep.subr.mxu0 0.0
      %v2680 = vand.u32 %v2352, 4294901760
      %2681 = vmatpush1.msra.mxu0 %v2680
      %2682 = vmatprep.subr.mxu0 0.0
      %v2683 = vand.u32 %v2353, 4294901760
      %2684 = vmatpush1.msra.mxu0 %v2683
      %2685 = vmatprep.subr.mxu0 0.0
      %v2686 = vand.u32 %v2354, 4294901760
      %2687 = vmatpush1.msra.mxu0 %v2686
      %2688 = vmatprep.subr.mxu0 0.0
      %v2689 = vand.u32 %v2355, 4294901760
      %2690 = vmatpush1.msra.mxu0 %v2689
      %2691 = vmatprep.subr.mxu0 0.0
      %v2692 = vand.u32 %v2356, 4294901760
      %2693 = vmatpush1.msra.mxu0 %v2692
      %2694 = vmatprep.subr.mxu0 0.0
      %v2695 = vand.u32 %v2357, 4294901760
      %2696 = vmatpush1.msra.mxu0 %v2695
      %2697 = vmatprep.subr.mxu0 0.0
      %2698 = vmatpush1.msra.mxu0 0.0
      %2699 = vmatprep.subr.mxu0 0.0
      %2700 = vmatpush1.msra.mxu0 0.0
      %2701 = vmatprep.subr.mxu0 0.0
      %2702 = vmatpush1.msra.mxu0 0.0
      %2703 = vmatprep.subr.mxu0 0.0
      %2704 = vmatpush1.msra.mxu0 0.0
      %2705 = vmatprep.subr.mxu0 0.0
      %2706 = vmatpush1.msra.mxu0 0.0
      %2707 = vmatprep.subr.mxu0 0.0
      %2708 = vmatpush1.msra.mxu0 0.0
      %2709 = vmatprep.subr.mxu0 0.0
      %2710 = vmatpush1.msra.mxu0 0.0
      %2711 = vmatprep.subr.mxu0 0.0
      %2712 = vmatpush1.msra.mxu0 0.0
      %2713 = vmatprep.subr.mxu0 0.0
      %2714 = vmatpush1.msra.mxu0 0.0
      %2715 = vmatprep.subr.mxu0 0.0
      %2716 = vmatpush1.msra.mxu0 0.0
      %2717 = vmatprep.subr.mxu0 0.0
      %2718 = vmatpush1.msra.mxu0 0.0
      %2719 = vmatprep.subr.mxu0 0.0
      %2720 = vmatpush1.msra.mxu0 0.0
      %2721 = vmatprep.subr.mxu0 0.0
      %2722 = vmatpush1.msra.mxu0 0.0
      %2723 = vmatprep.subr.mxu0 0.0
      %2724 = vmatpush1.msra.mxu0 0.0
      %2725 = vmatprep.subr.mxu0 0.0
      %2726 = vmatpush1.msra.mxu0 0.0
      %2727 = vmatprep.subr.mxu0 0.0
      %2728 = vmatpush1.msra.mxu0 0.0
      %2729 = vmatprep.subr.mxu0 0.0
      %2730 = vmatpush1.msra.mxu0 0.0
      %2731 = vmatprep.subr.mxu0 0.0
      %2732 = vmatpush1.msra.mxu0 0.0
      %2733 = vmatprep.subr.mxu0 0.0
      %2734 = vmatpush1.msra.mxu0 0.0
      %2735 = vmatprep.subr.mxu0 0.0
      %2736 = vmatpush1.msra.mxu0 0.0
      %2737 = vmatprep.subr.mxu0 0.0
      %2738 = vmatpush1.msra.mxu0 0.0
      %2739 = vmatprep.subr.mxu0 0.0
      %2740 = vmatpush1.msra.mxu0 0.0
      %2741 = vmatprep.mubr.f32.mxu0 0.0
      %v2742 = vand.u32 %v2367, 4294901760
      %v2743 = vsub.f32 %v2367, %v2742
      %v2744 = vand.u32 %v2743, 4294901760
      %2745 = vmatmul.mubr.f32.gmra.mrb[0].mxu0 %v2744
      %v2746 = vpop.f32.mrb[0].mxu0
      %v2747 = vadd.f32 %v2664, %v2746
      %v2748 = vpop.f32.mrb[0].mxu0
      %2749 = vdwg.mxu0
      %2750 = vmatprep.subr.mxu0 0.0
      %v2751 = vand.u32 %v2348, 4294901760
      %v2752 = vsub.f32 %v2348, %v2751
      %v2753 = vand.u32 %v2752, 4294901760
      %2754 = vmatpush1.msra.mxu0 %v2753
      %2755 = vmatprep.subr.mxu0 0.0
      %v2756 = vand.u32 %v2349, 4294901760
      %v2757 = vsub.f32 %v2349, %v2756
      %v2758 = vand.u32 %v2757, 4294901760
      %2759 = vmatpush1.msra.mxu0 %v2758
      %2760 = vmatprep.subr.mxu0 0.0
      %v2761 = vand.u32 %v2350, 4294901760
      %v2762 = vsub.f32 %v2350, %v2761
      %v2763 = vand.u32 %v2762, 4294901760
      %2764 = vmatpush1.msra.mxu0 %v2763
      %2765 = vmatprep.subr.mxu0 0.0
      %v2766 = vand.u32 %v2351, 4294901760
      %v2767 = vsub.f32 %v2351, %v2766
      %v2768 = vand.u32 %v2767, 4294901760
      %2769 = vmatpush1.msra.mxu0 %v2768
      %2770 = vmatprep.subr.mxu0 0.0
      %v2771 = vand.u32 %v2352, 4294901760
      %v2772 = vsub.f32 %v2352, %v2771
      %v2773 = vand.u32 %v2772, 4294901760
      %2774 = vmatpush1.msra.mxu0 %v2773
      %2775 = vmatprep.subr.mxu0 0.0
      %v2776 = vand.u32 %v2353, 4294901760
      %v2777 = vsub.f32 %v2353, %v2776
      %v2778 = vand.u32 %v2777, 4294901760
      %2779 = vmatpush1.msra.mxu0 %v2778
      %2780 = vmatprep.subr.mxu0 0.0
      %v2781 = vand.u32 %v2354, 4294901760
      %v2782 = vsub.f32 %v2354, %v2781
      %v2783 = vand.u32 %v2782, 4294901760
      %2784 = vmatpush1.msra.mxu0 %v2783
      %2785 = vmatprep.subr.mxu0 0.0
      %v2786 = vand.u32 %v2355, 4294901760
      %v2787 = vsub.f32 %v2355, %v2786
      %v2788 = vand.u32 %v2787, 4294901760
      %2789 = vmatpush1.msra.mxu0 %v2788
      %2790 = vmatprep.subr.mxu0 0.0
      %v2791 = vand.u32 %v2356, 4294901760
      %v2792 = vsub.f32 %v2356, %v2791
      %v2793 = vand.u32 %v2792, 4294901760
      %2794 = vmatpush1.msra.mxu0 %v2793
      %2795 = vmatprep.subr.mxu0 0.0
      %v2796 = vand.u32 %v2357, 4294901760
      %v2797 = vsub.f32 %v2357, %v2796
      %v2798 = vand.u32 %v2797, 4294901760
      %2799 = vmatpush1.msra.mxu0 %v2798
      %2800 = vmatprep.subr.mxu0 0.0
      %2801 = vmatpush1.msra.mxu0 0.0
      %2802 = vmatprep.subr.mxu0 0.0
      %2803 = vmatpush1.msra.mxu0 0.0
      %2804 = vmatprep.subr.mxu0 0.0
      %2805 = vmatpush1.msra.mxu0 0.0
      %2806 = vmatprep.subr.mxu0 0.0
      %2807 = vmatpush1.msra.mxu0 0.0
      %2808 = vmatprep.subr.mxu0 0.0
      %2809 = vmatpush1.msra.mxu0 0.0
      %2810 = vmatprep.subr.mxu0 0.0
      %2811 = vmatpush1.msra.mxu0 0.0
      %2812 = vmatprep.subr.mxu0 0.0
      %2813 = vmatpush1.msra.mxu0 0.0
      %2814 = vmatprep.subr.mxu0 0.0
      %2815 = vmatpush1.msra.mxu0 0.0
      %2816 = vmatprep.subr.mxu0 0.0
      %2817 = vmatpush1.msra.mxu0 0.0
      %2818 = vmatprep.subr.mxu0 0.0
      %2819 = vmatpush1.msra.mxu0 0.0
      %2820 = vmatprep.subr.mxu0 0.0
      %2821 = vmatpush1.msra.mxu0 0.0
      %2822 = vmatprep.subr.mxu0 0.0
      %2823 = vmatpush1.msra.mxu0 0.0
      %2824 = vmatprep.subr.mxu0 0.0
      %2825 = vmatpush1.msra.mxu0 0.0
      %2826 = vmatprep.subr.mxu0 0.0
      %2827 = vmatpush1.msra.mxu0 0.0
      %2828 = vmatprep.subr.mxu0 0.0
      %2829 = vmatpush1.msra.mxu0 0.0
      %2830 = vmatprep.subr.mxu0 0.0
      %2831 = vmatpush1.msra.mxu0 0.0
      %2832 = vmatprep.subr.mxu0 0.0
      %2833 = vmatpush1.msra.mxu0 0.0
      %2834 = vmatprep.subr.mxu0 0.0
      %2835 = vmatpush1.msra.mxu0 0.0
      %2836 = vmatprep.subr.mxu0 0.0
      %2837 = vmatpush1.msra.mxu0 0.0
      %2838 = vmatprep.subr.mxu0 0.0
      %2839 = vmatpush1.msra.mxu0 0.0
      %2840 = vmatprep.subr.mxu0 0.0
      %2841 = vmatpush1.msra.mxu0 0.0
      %2842 = vmatprep.subr.mxu0 0.0
      %2843 = vmatpush1.msra.mxu0 0.0
      %2844 = vmatprep.mubr.f32.mxu0 0.0
      %v2845 = vand.u32 %v2367, 4294901760
      %2846 = vmatmul.mubr.f32.gmra.mrb[0].mxu0 %v2845
      %v2847 = vpop.f32.mrb[0].mxu0
      %v2848 = vadd.f32 %v2747, %v2847
      %v2849 = vpop.f32.mrb[0].mxu0
      %2850 = vdwg.mxu0
      %2851 = vmatprep.subr.mxu0 0.0
      %v2852 = vand.u32 %v2348, 4294901760
      %2853 = vmatpush1.msra.mxu0 %v2852
      %2854 = vmatprep.subr.mxu0 0.0
      %v2855 = vand.u32 %v2349, 4294901760
      %2856 = vmatpush1.msra.mxu0 %v2855
      %2857 = vmatprep.subr.mxu0 0.0
      %v2858 = vand.u32 %v2350, 4294901760
      %2859 = vmatpush1.msra.mxu0 %v2858
      %2860 = vmatprep.subr.mxu0 0.0
      %v2861 = vand.u32 %v2351, 4294901760
      %2862 = vmatpush1.msra.mxu0 %v2861
      %2863 = vmatprep.subr.mxu0 0.0
      %v2864 = vand.u32 %v2352, 4294901760
      %2865 = vmatpush1.msra.mxu0 %v2864
      %2866 = vmatprep.subr.mxu0 0.0
      %v2867 = vand.u32 %v2353, 4294901760
      %2868 = vmatpush1.msra.mxu0 %v2867
      %2869 = vmatprep.subr.mxu0 0.0
      %v2870 = vand.u32 %v2354, 4294901760
      %2871 = vmatpush1.msra.mxu0 %v2870
      %2872 = vmatprep.subr.mxu0 0.0
      %v2873 = vand.u32 %v2355, 4294901760
      %2874 = vmatpush1.msra.mxu0 %v2873
      %2875 = vmatprep.subr.mxu0 0.0
      %v2876 = vand.u32 %v2356, 4294901760
      %2877 = vmatpush1.msra.mxu0 %v2876
      %2878 = vmatprep.subr.mxu0 0.0
      %v2879 = vand.u32 %v2357, 4294901760
      %2880 = vmatpush1.msra.mxu0 %v2879
      %2881 = vmatprep.subr.mxu0 0.0
      %2882 = vmatpush1.msra.mxu0 0.0
      %2883 = vmatprep.subr.mxu0 0.0
      %2884 = vmatpush1.msra.mxu0 0.0
      %2885 = vmatprep.subr.mxu0 0.0
      %2886 = vmatpush1.msra.mxu0 0.0
      %2887 = vmatprep.subr.mxu0 0.0
      %2888 = vmatpush1.msra.mxu0 0.0
      %2889 = vmatprep.subr.mxu0 0.0
      %2890 = vmatpush1.msra.mxu0 0.0
      %2891 = vmatprep.subr.mxu0 0.0
      %2892 = vmatpush1.msra.mxu0 0.0
      %2893 = vmatprep.subr.mxu0 0.0
      %2894 = vmatpush1.msra.mxu0 0.0
      %2895 = vmatprep.subr.mxu0 0.0
      %2896 = vmatpush1.msra.mxu0 0.0
      %2897 = vmatprep.subr.mxu0 0.0
      %2898 = vmatpush1.msra.mxu0 0.0
      %2899 = vmatprep.subr.mxu0 0.0
      %2900 = vmatpush1.msra.mxu0 0.0
      %2901 = vmatprep.subr.mxu0 0.0
      %2902 = vmatpush1.msra.mxu0 0.0
      %2903 = vmatprep.subr.mxu0 0.0
      %2904 = vmatpush1.msra.mxu0 0.0
      %2905 = vmatprep.subr.mxu0 0.0
      %2906 = vmatpush1.msra.mxu0 0.0
      %2907 = vmatprep.subr.mxu0 0.0
      %2908 = vmatpush1.msra.mxu0 0.0
      %2909 = vmatprep.subr.mxu0 0.0
      %2910 = vmatpush1.msra.mxu0 0.0
      %2911 = vmatprep.subr.mxu0 0.0
      %2912 = vmatpush1.msra.mxu0 0.0
      %2913 = vmatprep.subr.mxu0 0.0
      %2914 = vmatpush1.msra.mxu0 0.0
      %2915 = vmatprep.subr.mxu0 0.0
      %2916 = vmatpush1.msra.mxu0 0.0
      %2917 = vmatprep.subr.mxu0 0.0
      %2918 = vmatpush1.msra.mxu0 0.0
      %2919 = vmatprep.subr.mxu0 0.0
      %2920 = vmatpush1.msra.mxu0 0.0
      %2921 = vmatprep.subr.mxu0 0.0
      %2922 = vmatpush1.msra.mxu0 0.0
      %2923 = vmatprep.subr.mxu0 0.0
      %2924 = vmatpush1.msra.mxu0 0.0
      %2925 = vmatprep.mubr.f32.mxu0 0.0
      %v2926 = vand.u32 %v2367, 4294901760
      %2927 = vmatmul.mubr.f32.gmra.mrb[0].mxu0 %v2926
      %v2928 = vpop.f32.mrb[0].mxu0
      %v2929 = vadd.f32 %v2848, %v2928
      %v2930 = vpop.f32.mrb[0].mxu0
      %2931 = vdwg.mxu0
      %vm2932 = vcmask 130048
      %2933 = vst.msk [vmem:[%s327] sm:$0xff] %vm2932, %v2929
      %p2934 = scmp.lt.s32.totalorder %s20, 1
      %s2935 = scalar_select %p2934, %s20, 1
      %s2936 = smul.addr %s2935, 8
      %s2937 = scalar_lea.vmem %s9, %s2936
      // Predicated region
      $region57: #{crnet_forward.1} parent=55 // pred_check
        %p2938 = pneg %p232
      $region58: #{crnet_forward.1} parent=55 // pred_check_branch
        %2940 = sbr.rel (%p2938) target = $region60
      $region59: #{crnet_forward.1} parent=55 // pred_region
        _
      $region60: #{crnet_forward.1} parent=55 // pred_fallthru
        _
    $region56: #{crnet_forward.1} parent=5 // pred_fallthru
      _
    %p2941 = scmp.le.s32.totalorder 2, %s15
    // Predicated region
    $region61: #{crnet_forward.1} parent=5 // pred_check
      %p2942 = pneg %p2941
    $region62: #{crnet_forward.1} parent=5 // pred_check_branch
      %2944 = sbr.rel (%p2942) target = $region64
    $region63: #{crnet_forward.1} parent=5 // pred_region
      %s2945 = ssub.s32 %s15, 2
      // Predicated region
      $region65: #{crnet_forward.1} parent=63 // pred_check
        %p2946 = pneg %p238
      $region66: #{crnet_forward.1} parent=63 // pred_check_branch
        %2948 = sbr.rel (%p2946) target = $region68
      $region67: #{crnet_forward.1} parent=63 // pred_region
        %p2949 = scmp.lt.s32.totalorder %s21, 1
        %s2950 = scalar_select %p2949, %s21, 1
        %s2951 = smul.addr %s2950, 8
        %s2952 = scalar_lea.vmem %s9, %s2951
      $region68: #{crnet_forward.1} parent=63 // pred_fallthru
        _
    $region64: #{crnet_forward.1} parent=5 // pred_fallthru
      _
  $region6: #{crnet_forward.1} parent=0 // loop_footer
    %s19 = sadd.s32 1, %s15
  $region7: #{crnet_forward.1} parent=0 // loop_footer_branch
    %14 = sbr.rel target = $region3
  $region8: #{crnet_forward.1} parent=0 // loop_exit
    _

</llo_original>
